<compile_context>
chip_gen: v7x
topology: tpu7x:2x2x1
jax: 0.10.0
libtpu: 0.0.40
codegen_flags: <defaults>
</compile_context>

<pallas_src>
import functools

import jax
import jax.numpy as jnp
from jax import lax
from jax.experimental import pallas as pl
from jax.experimental.pallas import tpu as pltpu


def _round_up(x, m):
    return ((x + m - 1) // m) * m


def time_lstm_kernel(ux_ref, ts_ref, wd_ref, bd_ref, wall_ref, out_ref,
                     h_sc, c_sc):
    """One (batch_block, seq_chunk) grid step: T_BLK recurrent timesteps."""
    H = h_sc.shape[-1]
    t_blk = ux_ref.shape[0]

    # zero-init hidden / cell state at the start of each batch block's sequence
    @pl.when(pl.program_id(1) == 0)
    def _():
        h_sc[...] = jnp.zeros_like(h_sc)
        c_sc[...] = jnp.zeros_like(c_sc)

    # weights stay VMEM-resident (constant-index BlockSpecs); load once per step
    wd = wd_ref[...]        # (H, H)   weight dtype (bf16 or f32)
    wall = wall_ref[...]    # (H, 4H)
    bd = bd_ref[...]        # (1, H)   f32

    def step(t, carry):
        h, c = carry                         # (b_blk, H) f32, live in vregs
        ux = ux_ref[t]                       # (b_blk, 4H) f32; includes b_all + b_u
        ts = ts_ref[t]                       # (b_blk, 1)  f32

        # time-decay adjustment of the cell state: c_s1 = tanh(W_d(c))
        c_s1 = jnp.tanh(
            jnp.dot(c.astype(wd.dtype), wd,
                    preferred_element_type=jnp.float32) + bd)
        c_adj = (c - c_s1) + c_s1 * ts       # (b,1) broadcast over H lanes

        # gates: recurrent projection + precomputed input projection
        gates = jnp.dot(h.astype(wall.dtype), wall,
                        preferred_element_type=jnp.float32) + ux

        f = jax.nn.sigmoid(gates[:, 0 * H:1 * H])
        i = jax.nn.sigmoid(gates[:, 1 * H:2 * H])
        o = jax.nn.sigmoid(gates[:, 2 * H:3 * H])
        c_tmp = jax.nn.sigmoid(gates[:, 3 * H:4 * H])  # sigmoid, as in the torch code

        c_new = f * c_adj + i * c_tmp
        h_new = o * jnp.tanh(c_new)
        out_ref[t] = h_new
        return h_new, c_new

    h, c = lax.fori_loop(0, t_blk, step, (h_sc[...], c_sc[...]), unroll=True)
    h_sc[...] = h
    c_sc[...] = c


@functools.partial(jax.jit,
                   static_argnames=("reverse", "t_blk", "b_blk", "weight_dtype"))
def time_lstm(inputs, timestamps, params, reverse=False, *,
              t_blk=8, b_blk=8, weight_dtype=jnp.bfloat16):
    """inputs: (b, seq, E) f32; timestamps: (b, seq) f32 -> (b, seq, H) f32."""
    b, seq, E = inputs.shape
    H = params["W_d"].shape[0]

    H_pad = _round_up(H, 128)            # lane-dense gate blocks / output
    b_blk = _round_up(b_blk, 8)          # sublane alignment
    b_pad = _round_up(b, b_blk)
    seq_pad = _round_up(seq, t_blk)

    # --- weight prep: pad each gate's out dim (and hidden in dims) to H_pad
    #     with zeros, so padded lanes never contaminate real lanes ----------
    def pad_gate_w(w):                         # (4H, in) -> (4*H_pad, in)
        w4 = w.reshape(4, H, w.shape[1])
        w4 = jnp.pad(w4, ((0, 0), (0, H_pad - H), (0, 0)))
        return w4.reshape(4 * H_pad, w.shape[1])

    def pad_gate_b(v):                         # (4H,) -> (4*H_pad,)
        v4 = jnp.pad(v.reshape(4, H), ((0, 0), (0, H_pad - H)))
        return v4.reshape(4 * H_pad)

    wall = jnp.pad(pad_gate_w(params["W_all"]), ((0, 0), (0, H_pad - H)))
    wall_t = wall.T.astype(weight_dtype)                     # (H_pad, 4*H_pad)
    uall = pad_gate_w(params["U_all"])                       # (4*H_pad, E)
    b_gate = pad_gate_b(params["b_all"]) + pad_gate_b(params["b_u"])  # folded bias
    wd = jnp.pad(params["W_d"], ((0, H_pad - H), (0, H_pad - H)))
    wd_t = wd.T.astype(weight_dtype)                         # (H_pad, H_pad)
    bd = jnp.pad(params["b_d"], (0, H_pad - H))[None, :].astype(jnp.float32)

    # --- hoist the input projection out of the recurrence (parallel matmul) -
    x = inputs.astype(jnp.float32)
    ux = jnp.einsum("bse,ge->bsg", x, uall.astype(jnp.float32)) + b_gate
    ux = jnp.pad(ux, ((0, b_pad - b), (0, seq_pad - seq), (0, 0)))
    ux = jnp.transpose(ux, (1, 0, 2))                        # (seq_pad, b_pad, 4*H_pad)

    ts = jnp.pad(timestamps.astype(jnp.float32),
                 ((0, b_pad - b), (0, seq_pad - seq)))
    ts = jnp.transpose(ts, (1, 0))[:, :, None]               # (seq_pad, b_pad, 1)

    grid = (b_pad // b_blk, seq_pad // t_blk)

    out = pl.pallas_call(
        time_lstm_kernel,
        out_shape=jax.ShapeDtypeStruct((seq_pad, b_pad, H_pad), jnp.float32),
        grid_spec=pltpu.PrefetchScalarGridSpec(
            num_scalar_prefetch=0,
            grid=grid,
            in_specs=[
                pl.BlockSpec((t_blk, b_blk, 4 * H_pad),
                             lambda bb, sc: (sc, bb, 0)),          # Ux chunk
                pl.BlockSpec((t_blk, b_blk, 1),
                             lambda bb, sc: (sc, bb, 0)),          # timestamps chunk
                pl.BlockSpec((H_pad, H_pad), lambda bb, sc: (0, 0)),      # W_d^T
                pl.BlockSpec((1, H_pad), lambda bb, sc: (0, 0)),          # b_d
                pl.BlockSpec((H_pad, 4 * H_pad), lambda bb, sc: (0, 0)),  # W_all^T
            ],
            out_specs=pl.BlockSpec((t_blk, b_blk, H_pad),
                                   lambda bb, sc: (sc, bb, 0)),
            scratch_shapes=[
                pltpu.VMEM((b_blk, H_pad), jnp.float32),   # h state (persists)
                pltpu.VMEM((b_blk, H_pad), jnp.float32),   # c state (persists)
            ],
        ),
        compiler_params=pltpu.CompilerParams(
            # batch blocks are independent recurrences (megacore-parallel on
            # v7x); the sequence-chunk axis is a true recurrence -> arbitrary.
            dimension_semantics=("parallel", "arbitrary"),
            vmem_limit_bytes=64 * 1024 * 1024,
        ),
    )(ux, ts, wd_t, bd, wall_t)

    out = jnp.transpose(out, (1, 0, 2))[:b, :seq, :H]        # (b, seq, H)
    if reverse:
        # matches the torch module: sequence processed forward, outputs reversed
        out = jnp.flip(out, axis=1)
    return out


def time_lstm_ref(inputs, timestamps, params, reverse=False):
    """Pure-JAX f32 reference mirroring the PyTorch forward."""
    b, seq, E = inputs.shape
    H = params["W_d"].shape[0]
    h = jnp.zeros((b, H), jnp.float32)
    c = jnp.zeros((b, H), jnp.float32)
    outs_list = []
    for s in range(seq):
        c_s1 = jnp.tanh(c @ params["W_d"].T + params["b_d"])
        c_s2 = c_s1 * timestamps[:, s:s + 1]
        c_adj = (c - c_s1) + c_s2
        gates = (h @ params["W_all"].T + params["b_all"]
                 + inputs[:, s] @ params["U_all"].T + params["b_u"])
        f, i, o, ct = jnp.split(gates, 4, axis=1)
        f, i, o, ct = map(jax.nn.sigmoid, (f, i, o, ct))
        c = f * c_adj + i * ct
        h = o * jnp.tanh(c)
        outs_list.append(h)
    out = jnp.stack(outs_list, axis=1)
    if reverse:
        out = jnp.flip(out, axis=1)
    return out


def init_params(key, input_size, hidden_size):
    """Deterministic init matching nn.Linear shapes (weight: (out, in))."""
    ks = jax.random.split(key, 6)

    def lin(kw, kb, out_f, in_f):
        bound = 1.0 / jnp.sqrt(in_f)
        w = jax.random.uniform(kw, (out_f, in_f), jnp.float32, -bound, bound)
        b = jax.random.uniform(kb, (out_f,), jnp.float32, -bound, bound)
        return w, b

    W_all, b_all = lin(ks[0], ks[1], 4 * hidden_size, hidden_size)
    U_all, b_u = lin(ks[2], ks[3], 4 * hidden_size, input_size)
    W_d, b_d = lin(ks[4], ks[5], hidden_size, hidden_size)
    return {"W_all": W_all, "b_all": b_all,
            "U_all": U_all, "b_u": b_u,
            "W_d": W_d, "b_d": b_d}


if __name__ == "__main__":
    B, SEQ, E, H = 2, 8, 4, 32

    key = jax.random.PRNGKey(0)
    k_in, k_ts, k_p = jax.random.split(key, 3)
    inputs = jax.random.normal(k_in, (B, SEQ, E), jnp.float32)
    timestamps = jax.random.uniform(k_ts, (B, SEQ), jnp.float32, 0.0, 1.0)
    params = init_params(k_p, E, H)

    ref = time_lstm_ref(inputs, timestamps, params, reverse=False)

    # f32-weight path: tight agreement with the pure-JAX / PyTorch reference
    out_f32 = jax.block_until_ready(
        time_lstm(inputs, timestamps, params, weight_dtype=jnp.float32))
    assert out_f32.shape == (B, SEQ, H)
    assert jnp.allclose(out_f32, ref, atol=1e-4, rtol=1e-4), "f32 mismatch vs reference"

    # optimized bf16-weight path (MXU-native); looser tolerance for bf16 matmuls
    out_bf16 = jax.block_until_ready(
        time_lstm(inputs, timestamps, params, weight_dtype=jnp.bfloat16))
    assert out_bf16.shape == (B, SEQ, H)
    assert jnp.allclose(out_bf16, ref, atol=5e-2, rtol=5e-2), "bf16 mismatch vs reference"

    print("KERNEL_OK")
</pallas_src>

<mosaic_0001>
module attributes {stable_mosaic.version = 11 : i64} {
  func.func @time_lstm_kernel(%arg0: i32, %arg1: i32, %arg2: memref<8x8x512xf32, #tpu.memory_space<vmem>>, %arg3: memref<8x8x1xf32, #tpu.memory_space<vmem>>, %arg4: memref<128x128xf32, #tpu.memory_space<vmem>>, %arg5: memref<1x128xf32, #tpu.memory_space<vmem>>, %arg6: memref<128x512xf32, #tpu.memory_space<vmem>>, %arg7: memref<8x8x128xf32, #tpu.memory_space<vmem>>, %arg8: memref<8x128xf32, #tpu.memory_space<vmem>>, %arg9: memref<8x128xf32, #tpu.memory_space<vmem>>) attributes {dimension_semantics = [#tpu.dimension_semantics<parallel>, #tpu.dimension_semantics<arbitrary>], iteration_bounds = array<i64: 1, 1>, scalar_prefetch = 0 : i64, scratch_operands = 2 : i64, tpu.core_type = #tpu.core_type<tc>, window_params = [{transform_indices = @transform_0, window_bounds = array<i64: 8, 8, 512>}, {transform_indices = @transform_1, window_bounds = array<i64: 8, 8, 1>}, {pipeline_mode = #tpu.pipeline_mode<synchronous>, transform_indices = @transform_2, window_bounds = array<i64: 128, 128>}, {pipeline_mode = #tpu.pipeline_mode<synchronous>, transform_indices = @transform_3, window_bounds = array<i64: 1, 128>}, {pipeline_mode = #tpu.pipeline_mode<synchronous>, transform_indices = @transform_4, window_bounds = array<i64: 128, 512>}, {transform_indices = @transform_5, window_bounds = array<i64: 8, 8, 128>}]} {
    %c0_i32 = arith.constant 0 : i32
    %0 = arith.cmpi eq, %arg1, %c0_i32 : i32
    %1 = arith.extui %0 : i1 to i32
    %c0_i32_0 = arith.constant 0 : i32
    %2 = arith.cmpi ne, %1, %c0_i32_0 : i32
    scf.if %2 {
      %cst_110 = arith.constant 0.000000e+00 : f32
      %402 = vector.broadcast %cst_110 : f32 to vector<8x128xf32>
      %c0_111 = arith.constant 0 : index
      %c0_112 = arith.constant 0 : index
      %403 = vector.load %arg8[%c0_111, %c0_112] : memref<8x128xf32, #tpu.memory_space<vmem>>, vector<8x128xf32>
      tpu.vector_store %arg8[%c0_111, %c0_112], %402 {strides = array<i32>} : memref<8x128xf32, #tpu.memory_space<vmem>>, vector<8x128xf32>,
      %cst_113 = arith.constant 0.000000e+00 : f32
      %404 = vector.broadcast %cst_113 : f32 to vector<8x128xf32>
      %c0_114 = arith.constant 0 : index
      %c0_115 = arith.constant 0 : index
      %405 = vector.load %arg9[%c0_114, %c0_115] : memref<8x128xf32, #tpu.memory_space<vmem>>, vector<8x128xf32>
      tpu.vector_store %arg9[%c0_114, %c0_115], %404 {strides = array<i32>} : memref<8x128xf32, #tpu.memory_space<vmem>>, vector<8x128xf32>,
    } else {
    }
    %c0 = arith.constant 0 : index
    %c0_1 = arith.constant 0 : index
    %3 = vector.load %arg4[%c0, %c0_1] : memref<128x128xf32, #tpu.memory_space<vmem>>, vector<128x128xf32>
    %c0_2 = arith.constant 0 : index
    %c0_3 = arith.constant 0 : index
    %4 = vector.load %arg6[%c0_2, %c0_3] : memref<128x512xf32, #tpu.memory_space<vmem>>, vector<128x512xf32>
    %c0_4 = arith.constant 0 : index
    %c0_5 = arith.constant 0 : index
    %5 = vector.load %arg5[%c0_4, %c0_5] : memref<1x128xf32, #tpu.memory_space<vmem>>, vector<1x128xf32>
    %c0_6 = arith.constant 0 : index
    %c0_7 = arith.constant 0 : index
    %6 = vector.load %arg8[%c0_6, %c0_7] : memref<8x128xf32, #tpu.memory_space<vmem>>, vector<8x128xf32>
    %c0_8 = arith.constant 0 : index
    %c0_9 = arith.constant 0 : index
    %7 = vector.load %arg9[%c0_8, %c0_9] : memref<8x128xf32, #tpu.memory_space<vmem>>, vector<8x128xf32>
    %c0_i32_10 = arith.constant 0 : i32
    %8 = arith.index_cast %c0_i32_10 : i32 to index
    %c0_11 = arith.constant 0 : index
    %c0_12 = arith.constant 0 : index
    %9 = vector.load %arg2[%8, %c0_11, %c0_12] : memref<8x8x512xf32, #tpu.memory_space<vmem>>, vector<1x8x512xf32>
    %10 = vector.shape_cast %9 : vector<1x8x512xf32> to vector<8x512xf32>
    %11 = arith.index_cast %c0_i32_10 : i32 to index
    %c0_13 = arith.constant 0 : index
    %c0_14 = arith.constant 0 : index
    %12 = vector.load %arg3[%11, %c0_13, %c0_14] : memref<8x8x1xf32, #tpu.memory_space<vmem>>, vector<1x8x1xf32>
    %13 = vector.shape_cast %12 : vector<1x8x1xf32> to vector<8x1xf32>
    %cst = arith.constant dense<0.000000e+00> : vector<8x128xf32>
    %14 = tpu.matmul %7, %3, %cst {dimension_numbers = #tpu.dot_dimension_numbers<[1], [0], [0], [1], [0, 0, 1, 1], [], []>} : vector<8x128xf32>, vector<128x128xf32>, vector<8x128xf32> -> vector<8x128xf32>
    %15 = vector.broadcast %5 : vector<1x128xf32> to vector<8x128xf32>
    %16 = arith.addf %14, %15 : vector<8x128xf32>
    %17 = math.tanh %16 : vector<8x128xf32>
    %18 = arith.subf %7, %17 : vector<8x128xf32>
    %19 = vector.broadcast %13 : vector<8x1xf32> to vector<8x128xf32>
    %20 = arith.mulf %17, %19 : vector<8x128xf32>
    %21 = arith.addf %18, %20 : vector<8x128xf32>
    %cst_15 = arith.constant dense<0.000000e+00> : vector<8x512xf32>
    %22 = tpu.matmul %6, %4, %cst_15 {dimension_numbers = #tpu.dot_dimension_numbers<[1], [0], [0], [1], [0, 0, 1, 1], [], []>} : vector<8x128xf32>, vector<128x512xf32>, vector<8x512xf32> -> vector<8x512xf32>
    %23 = arith.addf %22, %10 : vector<8x512xf32>
    %24 = vector.extract_strided_slice %23 {offsets = [0, 0], sizes = [8, 128], strides = [1, 1]} : vector<8x512xf32> to vector<8x128xf32>
    %25 = arith.negf %24 : vector<8x128xf32>
    %26 = math.exp %25 : vector<8x128xf32>
    %cst_16 = arith.constant 1.000000e+00 : f32
    %27 = vector.broadcast %cst_16 : f32 to vector<8x128xf32>
    %28 = arith.addf %27, %26 : vector<8x128xf32>
    %29 = arith.divf %27, %28 : vector<8x128xf32>
    %30 = vector.extract_strided_slice %23 {offsets = [0, 128], sizes = [8, 128], strides = [1, 1]} : vector<8x512xf32> to vector<8x128xf32>
    %31 = arith.negf %30 : vector<8x128xf32>
    %32 = math.exp %31 : vector<8x128xf32>
    %cst_17 = arith.constant 1.000000e+00 : f32
    %33 = vector.broadcast %cst_17 : f32 to vector<8x128xf32>
    %34 = arith.addf %33, %32 : vector<8x128xf32>
    %35 = arith.divf %33, %34 : vector<8x128xf32>
    %36 = vector.extract_strided_slice %23 {offsets = [0, 256], sizes = [8, 128], strides = [1, 1]} : vector<8x512xf32> to vector<8x128xf32>
    %37 = arith.negf %36 : vector<8x128xf32>
    %38 = math.exp %37 : vector<8x128xf32>
    %cst_18 = arith.constant 1.000000e+00 : f32
    %39 = vector.broadcast %cst_18 : f32 to vector<8x128xf32>
    %40 = arith.addf %39, %38 : vector<8x128xf32>
    %41 = arith.divf %39, %40 : vector<8x128xf32>
    %42 = vector.extract_strided_slice %23 {offsets = [0, 384], sizes = [8, 128], strides = [1, 1]} : vector<8x512xf32> to vector<8x128xf32>
    %43 = arith.negf %42 : vector<8x128xf32>
    %44 = math.exp %43 : vector<8x128xf32>
    %cst_19 = arith.constant 1.000000e+00 : f32
    %45 = vector.broadcast %cst_19 : f32 to vector<8x128xf32>
    %46 = arith.addf %45, %44 : vector<8x128xf32>
    %47 = arith.divf %45, %46 : vector<8x128xf32>
    %48 = arith.mulf %29, %21 : vector<8x128xf32>
    %49 = arith.mulf %35, %47 : vector<8x128xf32>
    %50 = arith.addf %48, %49 : vector<8x128xf32>
    %51 = math.tanh %50 : vector<8x128xf32>
    %52 = arith.mulf %41, %51 : vector<8x128xf32>
    %53 = arith.index_cast %c0_i32_10 : i32 to index
    %c0_20 = arith.constant 0 : index
    %c0_21 = arith.constant 0 : index
    %54 = vector.load %arg7[%53, %c0_20, %c0_21] : memref<8x8x128xf32, #tpu.memory_space<vmem>>, vector<1x8x128xf32>
    %55 = vector.shape_cast %54 : vector<1x8x128xf32> to vector<8x128xf32>
    %56 = vector.shape_cast %52 : vector<8x128xf32> to vector<1x8x128xf32>
    tpu.vector_store %arg7[%53, %c0_20, %c0_21], %56 {strides = array<i32>} : memref<8x8x128xf32, #tpu.memory_space<vmem>>, vector<1x8x128xf32>,
    %c1_i32 = arith.constant 1 : i32
    %57 = arith.index_cast %c1_i32 : i32 to index
    %c0_22 = arith.constant 0 : index
    %c0_23 = arith.constant 0 : index
    %58 = vector.load %arg2[%57, %c0_22, %c0_23] : memref<8x8x512xf32, #tpu.memory_space<vmem>>, vector<1x8x512xf32>
    %59 = vector.shape_cast %58 : vector<1x8x512xf32> to vector<8x512xf32>
    %60 = arith.index_cast %c1_i32 : i32 to index
    %c0_24 = arith.constant 0 : index
    %c0_25 = arith.constant 0 : index
    %61 = vector.load %arg3[%60, %c0_24, %c0_25] : memref<8x8x1xf32, #tpu.memory_space<vmem>>, vector<1x8x1xf32>
    %62 = vector.shape_cast %61 : vector<1x8x1xf32> to vector<8x1xf32>
    %cst_26 = arith.constant dense<0.000000e+00> : vector<8x128xf32>
    %63 = tpu.matmul %50, %3, %cst_26 {dimension_numbers = #tpu.dot_dimension_numbers<[1], [0], [0], [1], [0, 0, 1, 1], [], []>} : vector<8x128xf32>, vector<128x128xf32>, vector<8x128xf32> -> vector<8x128xf32>
    %64 = vector.broadcast %5 : vector<1x128xf32> to vector<8x128xf32>
    %65 = arith.addf %63, %64 : vector<8x128xf32>
    %66 = math.tanh %65 : vector<8x128xf32>
    %67 = arith.subf %50, %66 : vector<8x128xf32>
    %68 = vector.broadcast %62 : vector<8x1xf32> to vector<8x128xf32>
    %69 = arith.mulf %66, %68 : vector<8x128xf32>
    %70 = arith.addf %67, %69 : vector<8x128xf32>
    %cst_27 = arith.constant dense<0.000000e+00> : vector<8x512xf32>
    %71 = tpu.matmul %52, %4, %cst_27 {dimension_numbers = #tpu.dot_dimension_numbers<[1], [0], [0], [1], [0, 0, 1, 1], [], []>} : vector<8x128xf32>, vector<128x512xf32>, vector<8x512xf32> -> vector<8x512xf32>
    %72 = arith.addf %71, %59 : vector<8x512xf32>
    %73 = vector.extract_strided_slice %72 {offsets = [0, 0], sizes = [8, 128], strides = [1, 1]} : vector<8x512xf32> to vector<8x128xf32>
    %74 = arith.negf %73 : vector<8x128xf32>
    %75 = math.exp %74 : vector<8x128xf32>
    %cst_28 = arith.constant 1.000000e+00 : f32
    %76 = vector.broadcast %cst_28 : f32 to vector<8x128xf32>
    %77 = arith.addf %76, %75 : vector<8x128xf32>
    %78 = arith.divf %76, %77 : vector<8x128xf32>
    %79 = vector.extract_strided_slice %72 {offsets = [0, 128], sizes = [8, 128], strides = [1, 1]} : vector<8x512xf32> to vector<8x128xf32>
    %80 = arith.negf %79 : vector<8x128xf32>
    %81 = math.exp %80 : vector<8x128xf32>
    %cst_29 = arith.constant 1.000000e+00 : f32
    %82 = vector.broadcast %cst_29 : f32 to vector<8x128xf32>
    %83 = arith.addf %82, %81 : vector<8x128xf32>
    %84 = arith.divf %82, %83 : vector<8x128xf32>
    %85 = vector.extract_strided_slice %72 {offsets = [0, 256], sizes = [8, 128], strides = [1, 1]} : vector<8x512xf32> to vector<8x128xf32>
    %86 = arith.negf %85 : vector<8x128xf32>
    %87 = math.exp %86 : vector<8x128xf32>
    %cst_30 = arith.constant 1.000000e+00 : f32
    %88 = vector.broadcast %cst_30 : f32 to vector<8x128xf32>
    %89 = arith.addf %88, %87 : vector<8x128xf32>
    %90 = arith.divf %88, %89 : vector<8x128xf32>
    %91 = vector.extract_strided_slice %72 {offsets = [0, 384], sizes = [8, 128], strides = [1, 1]} : vector<8x512xf32> to vector<8x128xf32>
    %92 = arith.negf %91 : vector<8x128xf32>
    %93 = math.exp %92 : vector<8x128xf32>
    %cst_31 = arith.constant 1.000000e+00 : f32
    %94 = vector.broadcast %cst_31 : f32 to vector<8x128xf32>
    %95 = arith.addf %94, %93 : vector<8x128xf32>
    %96 = arith.divf %94, %95 : vector<8x128xf32>
    %97 = arith.mulf %78, %70 : vector<8x128xf32>
    %98 = arith.mulf %84, %96 : vector<8x128xf32>
    %99 = arith.addf %97, %98 : vector<8x128xf32>
    %100 = math.tanh %99 : vector<8x128xf32>
    %101 = arith.mulf %90, %100 : vector<8x128xf32>
    %102 = arith.index_cast %c1_i32 : i32 to index
    %c0_32 = arith.constant 0 : index
    %c0_33 = arith.constant 0 : index
    %103 = vector.load %arg7[%102, %c0_32, %c0_33] : memref<8x8x128xf32, #tpu.memory_space<vmem>>, vector<1x8x128xf32>
    %104 = vector.shape_cast %103 : vector<1x8x128xf32> to vector<8x128xf32>
    %105 = vector.shape_cast %101 : vector<8x128xf32> to vector<1x8x128xf32>
    tpu.vector_store %arg7[%102, %c0_32, %c0_33], %105 {strides = array<i32>} : memref<8x8x128xf32, #tpu.memory_space<vmem>>, vector<1x8x128xf32>,
    %c2_i32 = arith.constant 2 : i32
    %106 = arith.index_cast %c2_i32 : i32 to index
    %c0_34 = arith.constant 0 : index
    %c0_35 = arith.constant 0 : index
    %107 = vector.load %arg2[%106, %c0_34, %c0_35] : memref<8x8x512xf32, #tpu.memory_space<vmem>>, vector<1x8x512xf32>
    %108 = vector.shape_cast %107 : vector<1x8x512xf32> to vector<8x512xf32>
    %109 = arith.index_cast %c2_i32 : i32 to index
    %c0_36 = arith.constant 0 : index
    %c0_37 = arith.constant 0 : index
    %110 = vector.load %arg3[%109, %c0_36, %c0_37] : memref<8x8x1xf32, #tpu.memory_space<vmem>>, vector<1x8x1xf32>
    %111 = vector.shape_cast %110 : vector<1x8x1xf32> to vector<8x1xf32>
    %cst_38 = arith.constant dense<0.000000e+00> : vector<8x128xf32>
    %112 = tpu.matmul %99, %3, %cst_38 {dimension_numbers = #tpu.dot_dimension_numbers<[1], [0], [0], [1], [0, 0, 1, 1], [], []>} : vector<8x128xf32>, vector<128x128xf32>, vector<8x128xf32> -> vector<8x128xf32>
    %113 = vector.broadcast %5 : vector<1x128xf32> to vector<8x128xf32>
    %114 = arith.addf %112, %113 : vector<8x128xf32>
    %115 = math.tanh %114 : vector<8x128xf32>
    %116 = arith.subf %99, %115 : vector<8x128xf32>
    %117 = vector.broadcast %111 : vector<8x1xf32> to vector<8x128xf32>
    %118 = arith.mulf %115, %117 : vector<8x128xf32>
    %119 = arith.addf %116, %118 : vector<8x128xf32>
    %cst_39 = arith.constant dense<0.000000e+00> : vector<8x512xf32>
    %120 = tpu.matmul %101, %4, %cst_39 {dimension_numbers = #tpu.dot_dimension_numbers<[1], [0], [0], [1], [0, 0, 1, 1], [], []>} : vector<8x128xf32>, vector<128x512xf32>, vector<8x512xf32> -> vector<8x512xf32>
    %121 = arith.addf %120, %108 : vector<8x512xf32>
    %122 = vector.extract_strided_slice %121 {offsets = [0, 0], sizes = [8, 128], strides = [1, 1]} : vector<8x512xf32> to vector<8x128xf32>
    %123 = arith.negf %122 : vector<8x128xf32>
    %124 = math.exp %123 : vector<8x128xf32>
    %cst_40 = arith.constant 1.000000e+00 : f32
    %125 = vector.broadcast %cst_40 : f32 to vector<8x128xf32>
    %126 = arith.addf %125, %124 : vector<8x128xf32>
    %127 = arith.divf %125, %126 : vector<8x128xf32>
    %128 = vector.extract_strided_slice %121 {offsets = [0, 128], sizes = [8, 128], strides = [1, 1]} : vector<8x512xf32> to vector<8x128xf32>
    %129 = arith.negf %128 : vector<8x128xf32>
    %130 = math.exp %129 : vector<8x128xf32>
    %cst_41 = arith.constant 1.000000e+00 : f32
    %131 = vector.broadcast %cst_41 : f32 to vector<8x128xf32>
    %132 = arith.addf %131, %130 : vector<8x128xf32>
    %133 = arith.divf %131, %132 : vector<8x128xf32>
    %134 = vector.extract_strided_slice %121 {offsets = [0, 256], sizes = [8, 128], strides = [1, 1]} : vector<8x512xf32> to vector<8x128xf32>
    %135 = arith.negf %134 : vector<8x128xf32>
    %136 = math.exp %135 : vector<8x128xf32>
    %cst_42 = arith.constant 1.000000e+00 : f32
    %137 = vector.broadcast %cst_42 : f32 to vector<8x128xf32>
    %138 = arith.addf %137, %136 : vector<8x128xf32>
    %139 = arith.divf %137, %138 : vector<8x128xf32>
    %140 = vector.extract_strided_slice %121 {offsets = [0, 384], sizes = [8, 128], strides = [1, 1]} : vector<8x512xf32> to vector<8x128xf32>
    %141 = arith.negf %140 : vector<8x128xf32>
    %142 = math.exp %141 : vector<8x128xf32>
    %cst_43 = arith.constant 1.000000e+00 : f32
    %143 = vector.broadcast %cst_43 : f32 to vector<8x128xf32>
    %144 = arith.addf %143, %142 : vector<8x128xf32>
    %145 = arith.divf %143, %144 : vector<8x128xf32>
    %146 = arith.mulf %127, %119 : vector<8x128xf32>
    %147 = arith.mulf %133, %145 : vector<8x128xf32>
    %148 = arith.addf %146, %147 : vector<8x128xf32>
    %149 = math.tanh %148 : vector<8x128xf32>
    %150 = arith.mulf %139, %149 : vector<8x128xf32>
    %151 = arith.index_cast %c2_i32 : i32 to index
    %c0_44 = arith.constant 0 : index
    %c0_45 = arith.constant 0 : index
    %152 = vector.load %arg7[%151, %c0_44, %c0_45] : memref<8x8x128xf32, #tpu.memory_space<vmem>>, vector<1x8x128xf32>
    %153 = vector.shape_cast %152 : vector<1x8x128xf32> to vector<8x128xf32>
    %154 = vector.shape_cast %150 : vector<8x128xf32> to vector<1x8x128xf32>
    tpu.vector_store %arg7[%151, %c0_44, %c0_45], %154 {strides = array<i32>} : memref<8x8x128xf32, #tpu.memory_space<vmem>>, vector<1x8x128xf32>,
    %c3_i32 = arith.constant 3 : i32
    %155 = arith.index_cast %c3_i32 : i32 to index
    %c0_46 = arith.constant 0 : index
    %c0_47 = arith.constant 0 : index
    %156 = vector.load %arg2[%155, %c0_46, %c0_47] : memref<8x8x512xf32, #tpu.memory_space<vmem>>, vector<1x8x512xf32>
    %157 = vector.shape_cast %156 : vector<1x8x512xf32> to vector<8x512xf32>
    %158 = arith.index_cast %c3_i32 : i32 to index
    %c0_48 = arith.constant 0 : index
    %c0_49 = arith.constant 0 : index
    %159 = vector.load %arg3[%158, %c0_48, %c0_49] : memref<8x8x1xf32, #tpu.memory_space<vmem>>, vector<1x8x1xf32>
    %160 = vector.shape_cast %159 : vector<1x8x1xf32> to vector<8x1xf32>
    %cst_50 = arith.constant dense<0.000000e+00> : vector<8x128xf32>
    %161 = tpu.matmul %148, %3, %cst_50 {dimension_numbers = #tpu.dot_dimension_numbers<[1], [0], [0], [1], [0, 0, 1, 1], [], []>} : vector<8x128xf32>, vector<128x128xf32>, vector<8x128xf32> -> vector<8x128xf32>
    %162 = vector.broadcast %5 : vector<1x128xf32> to vector<8x128xf32>
    %163 = arith.addf %161, %162 : vector<8x128xf32>
    %164 = math.tanh %163 : vector<8x128xf32>
    %165 = arith.subf %148, %164 : vector<8x128xf32>
    %166 = vector.broadcast %160 : vector<8x1xf32> to vector<8x128xf32>
    %167 = arith.mulf %164, %166 : vector<8x128xf32>
    %168 = arith.addf %165, %167 : vector<8x128xf32>
    %cst_51 = arith.constant dense<0.000000e+00> : vector<8x512xf32>
    %169 = tpu.matmul %150, %4, %cst_51 {dimension_numbers = #tpu.dot_dimension_numbers<[1], [0], [0], [1], [0, 0, 1, 1], [], []>} : vector<8x128xf32>, vector<128x512xf32>, vector<8x512xf32> -> vector<8x512xf32>
    %170 = arith.addf %169, %157 : vector<8x512xf32>
    %171 = vector.extract_strided_slice %170 {offsets = [0, 0], sizes = [8, 128], strides = [1, 1]} : vector<8x512xf32> to vector<8x128xf32>
    %172 = arith.negf %171 : vector<8x128xf32>
    %173 = math.exp %172 : vector<8x128xf32>
    %cst_52 = arith.constant 1.000000e+00 : f32
    %174 = vector.broadcast %cst_52 : f32 to vector<8x128xf32>
    %175 = arith.addf %174, %173 : vector<8x128xf32>
    %176 = arith.divf %174, %175 : vector<8x128xf32>
    %177 = vector.extract_strided_slice %170 {offsets = [0, 128], sizes = [8, 128], strides = [1, 1]} : vector<8x512xf32> to vector<8x128xf32>
    %178 = arith.negf %177 : vector<8x128xf32>
    %179 = math.exp %178 : vector<8x128xf32>
    %cst_53 = arith.constant 1.000000e+00 : f32
    %180 = vector.broadcast %cst_53 : f32 to vector<8x128xf32>
    %181 = arith.addf %180, %179 : vector<8x128xf32>
    %182 = arith.divf %180, %181 : vector<8x128xf32>
    %183 = vector.extract_strided_slice %170 {offsets = [0, 256], sizes = [8, 128], strides = [1, 1]} : vector<8x512xf32> to vector<8x128xf32>
    %184 = arith.negf %183 : vector<8x128xf32>
    %185 = math.exp %184 : vector<8x128xf32>
    %cst_54 = arith.constant 1.000000e+00 : f32
    %186 = vector.broadcast %cst_54 : f32 to vector<8x128xf32>
    %187 = arith.addf %186, %185 : vector<8x128xf32>
    %188 = arith.divf %186, %187 : vector<8x128xf32>
    %189 = vector.extract_strided_slice %170 {offsets = [0, 384], sizes = [8, 128], strides = [1, 1]} : vector<8x512xf32> to vector<8x128xf32>
    %190 = arith.negf %189 : vector<8x128xf32>
    %191 = math.exp %190 : vector<8x128xf32>
    %cst_55 = arith.constant 1.000000e+00 : f32
    %192 = vector.broadcast %cst_55 : f32 to vector<8x128xf32>
    %193 = arith.addf %192, %191 : vector<8x128xf32>
    %194 = arith.divf %192, %193 : vector<8x128xf32>
    %195 = arith.mulf %176, %168 : vector<8x128xf32>
    %196 = arith.mulf %182, %194 : vector<8x128xf32>
    %197 = arith.addf %195, %196 : vector<8x128xf32>
    %198 = math.tanh %197 : vector<8x128xf32>
    %199 = arith.mulf %188, %198 : vector<8x128xf32>
    %200 = arith.index_cast %c3_i32 : i32 to index
    %c0_56 = arith.constant 0 : index
    %c0_57 = arith.constant 0 : index
    %201 = vector.load %arg7[%200, %c0_56, %c0_57] : memref<8x8x128xf32, #tpu.memory_space<vmem>>, vector<1x8x128xf32>
    %202 = vector.shape_cast %201 : vector<1x8x128xf32> to vector<8x128xf32>
    %203 = vector.shape_cast %199 : vector<8x128xf32> to vector<1x8x128xf32>
    tpu.vector_store %arg7[%200, %c0_56, %c0_57], %203 {strides = array<i32>} : memref<8x8x128xf32, #tpu.memory_space<vmem>>, vector<1x8x128xf32>,
    %c4_i32 = arith.constant 4 : i32
    %204 = arith.index_cast %c4_i32 : i32 to index
    %c0_58 = arith.constant 0 : index
    %c0_59 = arith.constant 0 : index
    %205 = vector.load %arg2[%204, %c0_58, %c0_59] : memref<8x8x512xf32, #tpu.memory_space<vmem>>, vector<1x8x512xf32>
    %206 = vector.shape_cast %205 : vector<1x8x512xf32> to vector<8x512xf32>
    %207 = arith.index_cast %c4_i32 : i32 to index
    %c0_60 = arith.constant 0 : index
    %c0_61 = arith.constant 0 : index
    %208 = vector.load %arg3[%207, %c0_60, %c0_61] : memref<8x8x1xf32, #tpu.memory_space<vmem>>, vector<1x8x1xf32>
    %209 = vector.shape_cast %208 : vector<1x8x1xf32> to vector<8x1xf32>
    %cst_62 = arith.constant dense<0.000000e+00> : vector<8x128xf32>
    %210 = tpu.matmul %197, %3, %cst_62 {dimension_numbers = #tpu.dot_dimension_numbers<[1], [0], [0], [1], [0, 0, 1, 1], [], []>} : vector<8x128xf32>, vector<128x128xf32>, vector<8x128xf32> -> vector<8x128xf32>
    %211 = vector.broadcast %5 : vector<1x128xf32> to vector<8x128xf32>
    %212 = arith.addf %210, %211 : vector<8x128xf32>
    %213 = math.tanh %212 : vector<8x128xf32>
    %214 = arith.subf %197, %213 : vector<8x128xf32>
    %215 = vector.broadcast %209 : vector<8x1xf32> to vector<8x128xf32>
    %216 = arith.mulf %213, %215 : vector<8x128xf32>
    %217 = arith.addf %214, %216 : vector<8x128xf32>
    %cst_63 = arith.constant dense<0.000000e+00> : vector<8x512xf32>
    %218 = tpu.matmul %199, %4, %cst_63 {dimension_numbers = #tpu.dot_dimension_numbers<[1], [0], [0], [1], [0, 0, 1, 1], [], []>} : vector<8x128xf32>, vector<128x512xf32>, vector<8x512xf32> -> vector<8x512xf32>
    %219 = arith.addf %218, %206 : vector<8x512xf32>
    %220 = vector.extract_strided_slice %219 {offsets = [0, 0], sizes = [8, 128], strides = [1, 1]} : vector<8x512xf32> to vector<8x128xf32>
    %221 = arith.negf %220 : vector<8x128xf32>
    %222 = math.exp %221 : vector<8x128xf32>
    %cst_64 = arith.constant 1.000000e+00 : f32
    %223 = vector.broadcast %cst_64 : f32 to vector<8x128xf32>
    %224 = arith.addf %223, %222 : vector<8x128xf32>
    %225 = arith.divf %223, %224 : vector<8x128xf32>
    %226 = vector.extract_strided_slice %219 {offsets = [0, 128], sizes = [8, 128], strides = [1, 1]} : vector<8x512xf32> to vector<8x128xf32>
    %227 = arith.negf %226 : vector<8x128xf32>
    %228 = math.exp %227 : vector<8x128xf32>
    %cst_65 = arith.constant 1.000000e+00 : f32
    %229 = vector.broadcast %cst_65 : f32 to vector<8x128xf32>
    %230 = arith.addf %229, %228 : vector<8x128xf32>
    %231 = arith.divf %229, %230 : vector<8x128xf32>
    %232 = vector.extract_strided_slice %219 {offsets = [0, 256], sizes = [8, 128], strides = [1, 1]} : vector<8x512xf32> to vector<8x128xf32>
    %233 = arith.negf %232 : vector<8x128xf32>
    %234 = math.exp %233 : vector<8x128xf32>
    %cst_66 = arith.constant 1.000000e+00 : f32
    %235 = vector.broadcast %cst_66 : f32 to vector<8x128xf32>
    %236 = arith.addf %235, %234 : vector<8x128xf32>
    %237 = arith.divf %235, %236 : vector<8x128xf32>
    %238 = vector.extract_strided_slice %219 {offsets = [0, 384], sizes = [8, 128], strides = [1, 1]} : vector<8x512xf32> to vector<8x128xf32>
    %239 = arith.negf %238 : vector<8x128xf32>
    %240 = math.exp %239 : vector<8x128xf32>
    %cst_67 = arith.constant 1.000000e+00 : f32
    %241 = vector.broadcast %cst_67 : f32 to vector<8x128xf32>
    %242 = arith.addf %241, %240 : vector<8x128xf32>
    %243 = arith.divf %241, %242 : vector<8x128xf32>
    %244 = arith.mulf %225, %217 : vector<8x128xf32>
    %245 = arith.mulf %231, %243 : vector<8x128xf32>
    %246 = arith.addf %244, %245 : vector<8x128xf32>
    %247 = math.tanh %246 : vector<8x128xf32>
    %248 = arith.mulf %237, %247 : vector<8x128xf32>
    %249 = arith.index_cast %c4_i32 : i32 to index
    %c0_68 = arith.constant 0 : index
    %c0_69 = arith.constant 0 : index
    %250 = vector.load %arg7[%249, %c0_68, %c0_69] : memref<8x8x128xf32, #tpu.memory_space<vmem>>, vector<1x8x128xf32>
    %251 = vector.shape_cast %250 : vector<1x8x128xf32> to vector<8x128xf32>
    %252 = vector.shape_cast %248 : vector<8x128xf32> to vector<1x8x128xf32>
    tpu.vector_store %arg7[%249, %c0_68, %c0_69], %252 {strides = array<i32>} : memref<8x8x128xf32, #tpu.memory_space<vmem>>, vector<1x8x128xf32>,
    %c5_i32 = arith.constant 5 : i32
    %253 = arith.index_cast %c5_i32 : i32 to index
    %c0_70 = arith.constant 0 : index
    %c0_71 = arith.constant 0 : index
    %254 = vector.load %arg2[%253, %c0_70, %c0_71] : memref<8x8x512xf32, #tpu.memory_space<vmem>>, vector<1x8x512xf32>
    %255 = vector.shape_cast %254 : vector<1x8x512xf32> to vector<8x512xf32>
    %256 = arith.index_cast %c5_i32 : i32 to index
    %c0_72 = arith.constant 0 : index
    %c0_73 = arith.constant 0 : index
    %257 = vector.load %arg3[%256, %c0_72, %c0_73] : memref<8x8x1xf32, #tpu.memory_space<vmem>>, vector<1x8x1xf32>
    %258 = vector.shape_cast %257 : vector<1x8x1xf32> to vector<8x1xf32>
    %cst_74 = arith.constant dense<0.000000e+00> : vector<8x128xf32>
    %259 = tpu.matmul %246, %3, %cst_74 {dimension_numbers = #tpu.dot_dimension_numbers<[1], [0], [0], [1], [0, 0, 1, 1], [], []>} : vector<8x128xf32>, vector<128x128xf32>, vector<8x128xf32> -> vector<8x128xf32>
    %260 = vector.broadcast %5 : vector<1x128xf32> to vector<8x128xf32>
    %261 = arith.addf %259, %260 : vector<8x128xf32>
    %262 = math.tanh %261 : vector<8x128xf32>
    %263 = arith.subf %246, %262 : vector<8x128xf32>
    %264 = vector.broadcast %258 : vector<8x1xf32> to vector<8x128xf32>
    %265 = arith.mulf %262, %264 : vector<8x128xf32>
    %266 = arith.addf %263, %265 : vector<8x128xf32>
    %cst_75 = arith.constant dense<0.000000e+00> : vector<8x512xf32>
    %267 = tpu.matmul %248, %4, %cst_75 {dimension_numbers = #tpu.dot_dimension_numbers<[1], [0], [0], [1], [0, 0, 1, 1], [], []>} : vector<8x128xf32>, vector<128x512xf32>, vector<8x512xf32> -> vector<8x512xf32>
    %268 = arith.addf %267, %255 : vector<8x512xf32>
    %269 = vector.extract_strided_slice %268 {offsets = [0, 0], sizes = [8, 128], strides = [1, 1]} : vector<8x512xf32> to vector<8x128xf32>
    %270 = arith.negf %269 : vector<8x128xf32>
    %271 = math.exp %270 : vector<8x128xf32>
    %cst_76 = arith.constant 1.000000e+00 : f32
    %272 = vector.broadcast %cst_76 : f32 to vector<8x128xf32>
    %273 = arith.addf %272, %271 : vector<8x128xf32>
    %274 = arith.divf %272, %273 : vector<8x128xf32>
    %275 = vector.extract_strided_slice %268 {offsets = [0, 128], sizes = [8, 128], strides = [1, 1]} : vector<8x512xf32> to vector<8x128xf32>
    %276 = arith.negf %275 : vector<8x128xf32>
    %277 = math.exp %276 : vector<8x128xf32>
    %cst_77 = arith.constant 1.000000e+00 : f32
    %278 = vector.broadcast %cst_77 : f32 to vector<8x128xf32>
    %279 = arith.addf %278, %277 : vector<8x128xf32>
    %280 = arith.divf %278, %279 : vector<8x128xf32>
    %281 = vector.extract_strided_slice %268 {offsets = [0, 256], sizes = [8, 128], strides = [1, 1]} : vector<8x512xf32> to vector<8x128xf32>
    %282 = arith.negf %281 : vector<8x128xf32>
    %283 = math.exp %282 : vector<8x128xf32>
    %cst_78 = arith.constant 1.000000e+00 : f32
    %284 = vector.broadcast %cst_78 : f32 to vector<8x128xf32>
    %285 = arith.addf %284, %283 : vector<8x128xf32>
    %286 = arith.divf %284, %285 : vector<8x128xf32>
    %287 = vector.extract_strided_slice %268 {offsets = [0, 384], sizes = [8, 128], strides = [1, 1]} : vector<8x512xf32> to vector<8x128xf32>
    %288 = arith.negf %287 : vector<8x128xf32>
    %289 = math.exp %288 : vector<8x128xf32>
    %cst_79 = arith.constant 1.000000e+00 : f32
    %290 = vector.broadcast %cst_79 : f32 to vector<8x128xf32>
    %291 = arith.addf %290, %289 : vector<8x128xf32>
    %292 = arith.divf %290, %291 : vector<8x128xf32>
    %293 = arith.mulf %274, %266 : vector<8x128xf32>
    %294 = arith.mulf %280, %292 : vector<8x128xf32>
    %295 = arith.addf %293, %294 : vector<8x128xf32>
    %296 = math.tanh %295 : vector<8x128xf32>
    %297 = arith.mulf %286, %296 : vector<8x128xf32>
    %298 = arith.index_cast %c5_i32 : i32 to index
    %c0_80 = arith.constant 0 : index
    %c0_81 = arith.constant 0 : index
    %299 = vector.load %arg7[%298, %c0_80, %c0_81] : memref<8x8x128xf32, #tpu.memory_space<vmem>>, vector<1x8x128xf32>
    %300 = vector.shape_cast %299 : vector<1x8x128xf32> to vector<8x128xf32>
    %301 = vector.shape_cast %297 : vector<8x128xf32> to vector<1x8x128xf32>
    tpu.vector_store %arg7[%298, %c0_80, %c0_81], %301 {strides = array<i32>} : memref<8x8x128xf32, #tpu.memory_space<vmem>>, vector<1x8x128xf32>,
    %c6_i32 = arith.constant 6 : i32
    %302 = arith.index_cast %c6_i32 : i32 to index
    %c0_82 = arith.constant 0 : index
    %c0_83 = arith.constant 0 : index
    %303 = vector.load %arg2[%302, %c0_82, %c0_83] : memref<8x8x512xf32, #tpu.memory_space<vmem>>, vector<1x8x512xf32>
    %304 = vector.shape_cast %303 : vector<1x8x512xf32> to vector<8x512xf32>
    %305 = arith.index_cast %c6_i32 : i32 to index
    %c0_84 = arith.constant 0 : index
    %c0_85 = arith.constant 0 : index
    %306 = vector.load %arg3[%305, %c0_84, %c0_85] : memref<8x8x1xf32, #tpu.memory_space<vmem>>, vector<1x8x1xf32>
    %307 = vector.shape_cast %306 : vector<1x8x1xf32> to vector<8x1xf32>
    %cst_86 = arith.constant dense<0.000000e+00> : vector<8x128xf32>
    %308 = tpu.matmul %295, %3, %cst_86 {dimension_numbers = #tpu.dot_dimension_numbers<[1], [0], [0], [1], [0, 0, 1, 1], [], []>} : vector<8x128xf32>, vector<128x128xf32>, vector<8x128xf32> -> vector<8x128xf32>
    %309 = vector.broadcast %5 : vector<1x128xf32> to vector<8x128xf32>
    %310 = arith.addf %308, %309 : vector<8x128xf32>
    %311 = math.tanh %310 : vector<8x128xf32>
    %312 = arith.subf %295, %311 : vector<8x128xf32>
    %313 = vector.broadcast %307 : vector<8x1xf32> to vector<8x128xf32>
    %314 = arith.mulf %311, %313 : vector<8x128xf32>
    %315 = arith.addf %312, %314 : vector<8x128xf32>
    %cst_87 = arith.constant dense<0.000000e+00> : vector<8x512xf32>
    %316 = tpu.matmul %297, %4, %cst_87 {dimension_numbers = #tpu.dot_dimension_numbers<[1], [0], [0], [1], [0, 0, 1, 1], [], []>} : vector<8x128xf32>, vector<128x512xf32>, vector<8x512xf32> -> vector<8x512xf32>
    %317 = arith.addf %316, %304 : vector<8x512xf32>
    %318 = vector.extract_strided_slice %317 {offsets = [0, 0], sizes = [8, 128], strides = [1, 1]} : vector<8x512xf32> to vector<8x128xf32>
    %319 = arith.negf %318 : vector<8x128xf32>
    %320 = math.exp %319 : vector<8x128xf32>
    %cst_88 = arith.constant 1.000000e+00 : f32
    %321 = vector.broadcast %cst_88 : f32 to vector<8x128xf32>
    %322 = arith.addf %321, %320 : vector<8x128xf32>
    %323 = arith.divf %321, %322 : vector<8x128xf32>
    %324 = vector.extract_strided_slice %317 {offsets = [0, 128], sizes = [8, 128], strides = [1, 1]} : vector<8x512xf32> to vector<8x128xf32>
    %325 = arith.negf %324 : vector<8x128xf32>
    %326 = math.exp %325 : vector<8x128xf32>
    %cst_89 = arith.constant 1.000000e+00 : f32
    %327 = vector.broadcast %cst_89 : f32 to vector<8x128xf32>
    %328 = arith.addf %327, %326 : vector<8x128xf32>
    %329 = arith.divf %327, %328 : vector<8x128xf32>
    %330 = vector.extract_strided_slice %317 {offsets = [0, 256], sizes = [8, 128], strides = [1, 1]} : vector<8x512xf32> to vector<8x128xf32>
    %331 = arith.negf %330 : vector<8x128xf32>
    %332 = math.exp %331 : vector<8x128xf32>
    %cst_90 = arith.constant 1.000000e+00 : f32
    %333 = vector.broadcast %cst_90 : f32 to vector<8x128xf32>
    %334 = arith.addf %333, %332 : vector<8x128xf32>
    %335 = arith.divf %333, %334 : vector<8x128xf32>
    %336 = vector.extract_strided_slice %317 {offsets = [0, 384], sizes = [8, 128], strides = [1, 1]} : vector<8x512xf32> to vector<8x128xf32>
    %337 = arith.negf %336 : vector<8x128xf32>
    %338 = math.exp %337 : vector<8x128xf32>
    %cst_91 = arith.constant 1.000000e+00 : f32
    %339 = vector.broadcast %cst_91 : f32 to vector<8x128xf32>
    %340 = arith.addf %339, %338 : vector<8x128xf32>
    %341 = arith.divf %339, %340 : vector<8x128xf32>
    %342 = arith.mulf %323, %315 : vector<8x128xf32>
    %343 = arith.mulf %329, %341 : vector<8x128xf32>
    %344 = arith.addf %342, %343 : vector<8x128xf32>
    %345 = math.tanh %344 : vector<8x128xf32>
    %346 = arith.mulf %335, %345 : vector<8x128xf32>
    %347 = arith.index_cast %c6_i32 : i32 to index
    %c0_92 = arith.constant 0 : index
    %c0_93 = arith.constant 0 : index
    %348 = vector.load %arg7[%347, %c0_92, %c0_93] : memref<8x8x128xf32, #tpu.memory_space<vmem>>, vector<1x8x128xf32>
    %349 = vector.shape_cast %348 : vector<1x8x128xf32> to vector<8x128xf32>
    %350 = vector.shape_cast %346 : vector<8x128xf32> to vector<1x8x128xf32>
    tpu.vector_store %arg7[%347, %c0_92, %c0_93], %350 {strides = array<i32>} : memref<8x8x128xf32, #tpu.memory_space<vmem>>, vector<1x8x128xf32>,
    %c7_i32 = arith.constant 7 : i32
    %351 = arith.index_cast %c7_i32 : i32 to index
    %c0_94 = arith.constant 0 : index
    %c0_95 = arith.constant 0 : index
    %352 = vector.load %arg2[%351, %c0_94, %c0_95] : memref<8x8x512xf32, #tpu.memory_space<vmem>>, vector<1x8x512xf32>
    %353 = vector.shape_cast %352 : vector<1x8x512xf32> to vector<8x512xf32>
    %354 = arith.index_cast %c7_i32 : i32 to index
    %c0_96 = arith.constant 0 : index
    %c0_97 = arith.constant 0 : index
    %355 = vector.load %arg3[%354, %c0_96, %c0_97] : memref<8x8x1xf32, #tpu.memory_space<vmem>>, vector<1x8x1xf32>
    %356 = vector.shape_cast %355 : vector<1x8x1xf32> to vector<8x1xf32>
    %cst_98 = arith.constant dense<0.000000e+00> : vector<8x128xf32>
    %357 = tpu.matmul %344, %3, %cst_98 {dimension_numbers = #tpu.dot_dimension_numbers<[1], [0], [0], [1], [0, 0, 1, 1], [], []>} : vector<8x128xf32>, vector<128x128xf32>, vector<8x128xf32> -> vector<8x128xf32>
    %358 = vector.broadcast %5 : vector<1x128xf32> to vector<8x128xf32>
    %359 = arith.addf %357, %358 : vector<8x128xf32>
    %360 = math.tanh %359 : vector<8x128xf32>
    %361 = arith.subf %344, %360 : vector<8x128xf32>
    %362 = vector.broadcast %356 : vector<8x1xf32> to vector<8x128xf32>
    %363 = arith.mulf %360, %362 : vector<8x128xf32>
    %364 = arith.addf %361, %363 : vector<8x128xf32>
    %cst_99 = arith.constant dense<0.000000e+00> : vector<8x512xf32>
    %365 = tpu.matmul %346, %4, %cst_99 {dimension_numbers = #tpu.dot_dimension_numbers<[1], [0], [0], [1], [0, 0, 1, 1], [], []>} : vector<8x128xf32>, vector<128x512xf32>, vector<8x512xf32> -> vector<8x512xf32>
    %366 = arith.addf %365, %353 : vector<8x512xf32>
    %367 = vector.extract_strided_slice %366 {offsets = [0, 0], sizes = [8, 128], strides = [1, 1]} : vector<8x512xf32> to vector<8x128xf32>
    %368 = arith.negf %367 : vector<8x128xf32>
    %369 = math.exp %368 : vector<8x128xf32>
    %cst_100 = arith.constant 1.000000e+00 : f32
    %370 = vector.broadcast %cst_100 : f32 to vector<8x128xf32>
    %371 = arith.addf %370, %369 : vector<8x128xf32>
    %372 = arith.divf %370, %371 : vector<8x128xf32>
    %373 = vector.extract_strided_slice %366 {offsets = [0, 128], sizes = [8, 128], strides = [1, 1]} : vector<8x512xf32> to vector<8x128xf32>
    %374 = arith.negf %373 : vector<8x128xf32>
    %375 = math.exp %374 : vector<8x128xf32>
    %cst_101 = arith.constant 1.000000e+00 : f32
    %376 = vector.broadcast %cst_101 : f32 to vector<8x128xf32>
    %377 = arith.addf %376, %375 : vector<8x128xf32>
    %378 = arith.divf %376, %377 : vector<8x128xf32>
    %379 = vector.extract_strided_slice %366 {offsets = [0, 256], sizes = [8, 128], strides = [1, 1]} : vector<8x512xf32> to vector<8x128xf32>
    %380 = arith.negf %379 : vector<8x128xf32>
    %381 = math.exp %380 : vector<8x128xf32>
    %cst_102 = arith.constant 1.000000e+00 : f32
    %382 = vector.broadcast %cst_102 : f32 to vector<8x128xf32>
    %383 = arith.addf %382, %381 : vector<8x128xf32>
    %384 = arith.divf %382, %383 : vector<8x128xf32>
    %385 = vector.extract_strided_slice %366 {offsets = [0, 384], sizes = [8, 128], strides = [1, 1]} : vector<8x512xf32> to vector<8x128xf32>
    %386 = arith.negf %385 : vector<8x128xf32>
    %387 = math.exp %386 : vector<8x128xf32>
    %cst_103 = arith.constant 1.000000e+00 : f32
    %388 = vector.broadcast %cst_103 : f32 to vector<8x128xf32>
    %389 = arith.addf %388, %387 : vector<8x128xf32>
    %390 = arith.divf %388, %389 : vector<8x128xf32>
    %391 = arith.mulf %372, %364 : vector<8x128xf32>
    %392 = arith.mulf %378, %390 : vector<8x128xf32>
    %393 = arith.addf %391, %392 : vector<8x128xf32>
    %394 = math.tanh %393 : vector<8x128xf32>
    %395 = arith.mulf %384, %394 : vector<8x128xf32>
    %396 = arith.index_cast %c7_i32 : i32 to index
    %c0_104 = arith.constant 0 : index
    %c0_105 = arith.constant 0 : index
    %397 = vector.load %arg7[%396, %c0_104, %c0_105] : memref<8x8x128xf32, #tpu.memory_space<vmem>>, vector<1x8x128xf32>
    %398 = vector.shape_cast %397 : vector<1x8x128xf32> to vector<8x128xf32>
    %399 = vector.shape_cast %395 : vector<8x128xf32> to vector<1x8x128xf32>
    tpu.vector_store %arg7[%396, %c0_104, %c0_105], %399 {strides = array<i32>} : memref<8x8x128xf32, #tpu.memory_space<vmem>>, vector<1x8x128xf32>,
    %c8_i32 = arith.constant 8 : i32
    %c0_106 = arith.constant 0 : index
    %c0_107 = arith.constant 0 : index
    %400 = vector.load %arg8[%c0_106, %c0_107] : memref<8x128xf32, #tpu.memory_space<vmem>>, vector<8x128xf32>
    tpu.vector_store %arg8[%c0_106, %c0_107], %395 {strides = array<i32>} : memref<8x128xf32, #tpu.memory_space<vmem>>, vector<8x128xf32>,
    %c0_108 = arith.constant 0 : index
    %c0_109 = arith.constant 0 : index
    %401 = vector.load %arg9[%c0_108, %c0_109] : memref<8x128xf32, #tpu.memory_space<vmem>>, vector<8x128xf32>
    tpu.vector_store %arg9[%c0_108, %c0_109], %393 {strides = array<i32>} : memref<8x128xf32, #tpu.memory_space<vmem>>, vector<8x128xf32>,
    return
  }
  func.func @transform_0(%arg0: i32, %arg1: i32) -> (i32, i32, i32) {
    %c0_i32 = arith.constant 0 : i32
    %c0_i32_0 = arith.constant 0 : i32
    return %arg1, %arg0, %c0_i32 : i32, i32, i32
  }
  func.func @transform_1(%arg0: i32, %arg1: i32) -> (i32, i32, i32) {
    %c0_i32 = arith.constant 0 : i32
    %c0_i32_0 = arith.constant 0 : i32
    return %arg1, %arg0, %c0_i32 : i32, i32, i32
  }
  func.func @transform_2(%arg0: i32, %arg1: i32) -> (i32, i32) {
    %c0_i32 = arith.constant 0 : i32
    %c0_i32_0 = arith.constant 0 : i32
    %c0_i32_1 = arith.constant 0 : i32
    return %c0_i32, %c0_i32_0 : i32, i32
  }
  func.func @transform_3(%arg0: i32, %arg1: i32) -> (i32, i32) {
    %c0_i32 = arith.constant 0 : i32
    %c0_i32_0 = arith.constant 0 : i32
    %c0_i32_1 = arith.constant 0 : i32
    return %c0_i32, %c0_i32_0 : i32, i32
  }
  func.func @transform_4(%arg0: i32, %arg1: i32) -> (i32, i32) {
    %c0_i32 = arith.constant 0 : i32
    %c0_i32_0 = arith.constant 0 : i32
    %c0_i32_1 = arith.constant 0 : i32
    return %c0_i32, %c0_i32_0 : i32, i32
  }
  func.func @transform_5(%arg0: i32, %arg1: i32) -> (i32, i32, i32) {
    %c0_i32 = arith.constant 0 : i32
    %c0_i32_0 = arith.constant 0 : i32
    return %arg1, %arg0, %c0_i32 : i32, i32, i32
  }
}

</mosaic_0001>

<llo_original>
// kernel: time_lstm.1
$region0: #{time_lstm.1}
  #allocation0 [shape = 'u32[]', space=smem, size = 0x4, offset = 0x4, fixed_abs, tag = 'smem constant byte address 0x4 - core index']
  #allocation1 [shape = 'u32[144,128]{1,0:T(1,128)}', space=vmem, size = 0x12000, scoped, tag = 'internal scratch']
  #allocation2 [shape = 'f32[8,128]{1,0:T(8,128)}', space=vmem, size = 0x1000, scoped, tag = 'scratch operand']
  #allocation3 [shape = 'f32[8,128]{1,0:T(8,128)}', space=vmem, size = 0x1000, scoped, tag = 'scratch operand']
  %s0 = inlined_call_operand.hbm [shape: f32[8,8,512], index: 0, kind: input, shape index: {}]
  %s1 = inlined_call_operand.hbm [shape: f32[8,8,1], index: 1, kind: input, shape index: {}]
  %s2 = inlined_call_operand.hbm [shape: f32[128,128], index: 2, kind: input, shape index: {}]
  %s3 = inlined_call_operand.hbm [shape: f32[1,128], index: 3, kind: input, shape index: {}]
  %s4 = inlined_call_operand.hbm [shape: f32[128,512], index: 4, kind: input, shape index: {}]
  %s5 = inlined_call_operand.hbm [shape: f32[8,8,128], index: 5, kind: output, shape index: {}]
  %s6 = sld [smem:[#allocation0]]
  $region54: #{time_lstm.1} parent=0
    _
  %s8 = ssub.s32 1, %s6
  %s9 = scalar_select 0, %s8, %s6
  $region1: #{time_lstm.1} parent=0
    #allocation4 [shape = 'u8[131072]{0}', space=vmem, size = 0x20000, scoped, tag = 'input window, operand 0, single buffered']
    #allocation5 [shape = 's32[1]{0}', space=sflag, size = 0x4, scoped, tag = 'scoped memory for time_lstm.1']
    #allocation6 [shape = 's32[1]{0}', space=sflag, size = 0x4, scoped, tag = 'scoped memory for time_lstm.1']
    #allocation7 [shape = 'u8[32768]{0}', space=vmem, size = 0x8000, scoped, tag = 'input window, operand 1, single buffered']
    #allocation8 [shape = 's32[1]{0}', space=sflag, size = 0x4, scoped, tag = 'scoped memory for time_lstm.1']
    #allocation9 [shape = 'u8[65536]{0}', space=vmem, size = 0x10000, scoped, tag = 'input window, operand 2, single buffered']
    #allocation10 [shape = 'u8[512]{0}', space=vmem, size = 0x400, scoped, tag = 'input window, operand 3, single buffered']
    #allocation11 [shape = 's32[1]{0}', space=sflag, size = 0x4, scoped, tag = 'scoped memory for time_lstm.1']
    #allocation12 [shape = 'u8[262144]{0}', space=vmem, size = 0x40000, scoped, tag = 'input window, operand 4, single buffered']
    #allocation13 [shape = 'u8[32768]{0}', space=vmem, size = 0x8000, scoped, tag = 'output window, operand 0, single buffered']
    %10 = vsyncpa [#allocation5], 0
    %11 = vsyncpa [#allocation8], 0
    %12 = vsyncpa [#allocation11], 0
    %13 = vsyncpa [#allocation6], 0
    // Predicated region
    $region2: #{time_lstm.1} parent=1 // pred_check
      _
    $region3: #{time_lstm.1} parent=1 // pred_check_branch
      %15 = sbr.rel (0) target = $region5
    $region4: #{time_lstm.1} parent=1 // pred_region
      %s17 = ssub.s32 4096, 4096
      %18 = vsyncadd [#allocation5], %s17
      %s19 = sshll.u32 [#allocation4], 4
      %s20 = int_to_ptr.vmem [resolvable:$true] %s19
      %25 = dma.hbm_to_vmem [thread:$0]  %s0, 4096, %s20, [#allocation5], 512, 512, 32
    $region5: #{time_lstm.1} parent=1 // pred_fallthru
      _
    // Predicated region
    $region6: #{time_lstm.1} parent=1 // pred_check
      _
    $region7: #{time_lstm.1} parent=1 // pred_check_branch
      %27 = sbr.rel (0) target = $region9
    $region8: #{time_lstm.1} parent=1 // pred_region
      %s29 = ssub.s32 1024, 1024
      %30 = vsyncadd [#allocation8], %s29
      %s31 = sshll.u32 [#allocation7], 4
      %s32 = int_to_ptr.vmem [resolvable:$true] %s31
      %37 = dma.hbm_to_vmem [thread:$0]  %s1, 1024, %s32, [#allocation8], 128, 128, 8
    $region9: #{time_lstm.1} parent=1 // pred_fallthru
      _
    // Predicated region
    $region10: #{time_lstm.1} parent=1 // pred_check
      _
    $region11: #{time_lstm.1} parent=1 // pred_check_branch
      %39 = sbr.rel (0) target = $region13
    $region12: #{time_lstm.1} parent=1 // pred_region
      %s41 = ssub.s32 2048, 2048
      %42 = vsyncadd [#allocation8], %s41
      %s43 = sshll.u32 [#allocation9], 4
      %s44 = int_to_ptr.vmem [resolvable:$true] %s43
      %49 = dma.hbm_to_vmem [thread:$0]  %s2, 2048, %s44, [#allocation8], 128, 128, 8
    $region13: #{time_lstm.1} parent=1 // pred_fallthru
      _
    // Predicated region
    $region14: #{time_lstm.1} parent=1 // pred_check
      _
    $region15: #{time_lstm.1} parent=1 // pred_check_branch
      %51 = sbr.rel (0) target = $region17
    $region16: #{time_lstm.1} parent=1 // pred_region
      %s53 = ssub.s32 16, 16
      %54 = vsyncadd [#allocation11], %s53
      %s56 = sshll.u32 [#allocation10], 4
      %s57 = int_to_ptr.vmem [resolvable:$true] %s56
      %59 = dma.hbm_to_vmem [thread:$0]  %s3, 16, %s57, [#allocation11]
    $region17: #{time_lstm.1} parent=1 // pred_fallthru
      _
    // Predicated region
    $region18: #{time_lstm.1} parent=1 // pred_check
      _
    $region19: #{time_lstm.1} parent=1 // pred_check_branch
      %61 = sbr.rel (0) target = $region21
    $region20: #{time_lstm.1} parent=1 // pred_region
      %s63 = ssub.s32 8192, 8192
      %64 = vsyncadd [#allocation11], %s63
      %s65 = sshll.u32 [#allocation12], 4
      %s66 = int_to_ptr.vmem [resolvable:$true] %s65
      %71 = dma.hbm_to_vmem [thread:$0]  %s4, 8192, %s66, [#allocation11], 512, 512, 32
    $region21: #{time_lstm.1} parent=1 // pred_fallthru
      _
    // Predicated region
    $region22: #{time_lstm.1} parent=1 // pred_check
      _
    $region23: #{time_lstm.1} parent=1 // pred_check_branch
      %73 = sbr.rel (0) target = $region25
    $region24: #{time_lstm.1} parent=1 // pred_region
      %74 = dma.done [#allocation5], 4096
    $region25: #{time_lstm.1} parent=1 // pred_fallthru
      _
    // Predicated region
    $region26: #{time_lstm.1} parent=1 // pred_check
      _
    $region27: #{time_lstm.1} parent=1 // pred_check_branch
      %76 = sbr.rel (0) target = $region29
    $region28: #{time_lstm.1} parent=1 // pred_region
      %77 = dma.done [#allocation8], 1024
    $region29: #{time_lstm.1} parent=1 // pred_fallthru
      _
    // Predicated region
    $region30: #{time_lstm.1} parent=1 // pred_check
      _
    $region31: #{time_lstm.1} parent=1 // pred_check_branch
      %79 = sbr.rel (0) target = $region33
    $region32: #{time_lstm.1} parent=1 // pred_region
      %80 = dma.done [#allocation8], 2048
    $region33: #{time_lstm.1} parent=1 // pred_fallthru
      _
    // Predicated region
    $region34: #{time_lstm.1} parent=1 // pred_check
      _
    $region35: #{time_lstm.1} parent=1 // pred_check_branch
      %82 = sbr.rel (0) target = $region37
    $region36: #{time_lstm.1} parent=1 // pred_region
      %83 = dma.done [#allocation11], 16
    $region37: #{time_lstm.1} parent=1 // pred_fallthru
      _
    // Predicated region
    $region38: #{time_lstm.1} parent=1 // pred_check
      _
    $region39: #{time_lstm.1} parent=1 // pred_check_branch
      %85 = sbr.rel (0) target = $region41
    $region40: #{time_lstm.1} parent=1 // pred_region
      %86 = dma.done [#allocation11], 8192
    $region41: #{time_lstm.1} parent=1 // pred_fallthru
      _
    %p87 = scmp.eq.s32.totalorder 0, 0
    // Predicated region
    $region42: #{time_lstm.1} parent=1 // pred_check
      %p88 = pneg %p87
    $region43: #{time_lstm.1} parent=1 // pred_check_branch
      %90 = sbr.rel (%p88) target = $region45
    $region44: #{time_lstm.1} parent=1 // pred_region
      %91 = vst [vmem:[#allocation2] sm:$0xff] 0.0
      %92 = vst [vmem:[#allocation3] sm:$0xff] 0.0
    $region45: #{time_lstm.1} parent=1 // pred_fallthru
      _
    %v93 = vld [vmem:[#allocation9] sm:$0xff]
    %v94 = vld [vmem:[#allocation9 + $0x8] sm:$0xff]
    %v95 = vld [vmem:[#allocation9 + $0x10] sm:$0xff]
    %v96 = vld [vmem:[#allocation9 + $0x18] sm:$0xff]
    %v97 = vld [vmem:[#allocation9 + $0x20] sm:$0xff]
    %v98 = vld [vmem:[#allocation9 + $0x28] sm:$0xff]
    %v99 = vld [vmem:[#allocation9 + $0x30] sm:$0xff]
    %v100 = vld [vmem:[#allocation9 + $0x38] sm:$0xff]
    %v101 = vld [vmem:[#allocation9 + $0x40] sm:$0xff]
    %v102 = vld [vmem:[#allocation9 + $0x48] sm:$0xff]
    %v103 = vld [vmem:[#allocation9 + $0x50] sm:$0xff]
    %v104 = vld [vmem:[#allocation9 + $0x58] sm:$0xff]
    %v105 = vld [vmem:[#allocation9 + $0x60] sm:$0xff]
    %v106 = vld [vmem:[#allocation9 + $0x68] sm:$0xff]
    %v107 = vld [vmem:[#allocation9 + $0x70] sm:$0xff]
    %v108 = vld [vmem:[#allocation9 + $0x78] sm:$0xff]
    %v109 = vld [vmem:[#allocation12] sm:$0xff]
    %v110 = vld [vmem:[#allocation12 + $0x8] sm:$0xff]
    %v111 = vld [vmem:[#allocation12 + $0x10] sm:$0xff]
    %v112 = vld [vmem:[#allocation12 + $0x18] sm:$0xff]
    %v113 = vld [vmem:[#allocation12 + $0x20] sm:$0xff]
    %v114 = vld [vmem:[#allocation12 + $0x28] sm:$0xff]
    %v115 = vld [vmem:[#allocation12 + $0x30] sm:$0xff]
    %v116 = vld [vmem:[#allocation12 + $0x38] sm:$0xff]
    %v117 = vld [vmem:[#allocation12 + $0x40] sm:$0xff]
    %v118 = vld [vmem:[#allocation12 + $0x48] sm:$0xff]
    %v119 = vld [vmem:[#allocation12 + $0x50] sm:$0xff]
    %v120 = vld [vmem:[#allocation12 + $0x58] sm:$0xff]
    %v121 = vld [vmem:[#allocation12 + $0x60] sm:$0xff]
    %v122 = vld [vmem:[#allocation12 + $0x68] sm:$0xff]
    %v123 = vld [vmem:[#allocation12 + $0x70] sm:$0xff]
    %v124 = vld [vmem:[#allocation12 + $0x78] sm:$0xff]
    %v125 = vld [vmem:[#allocation12 + $0x80] sm:$0xff]
    %v126 = vld [vmem:[#allocation12 + $0x88] sm:$0xff]
    %v127 = vld [vmem:[#allocation12 + $0x90] sm:$0xff]
    %v128 = vld [vmem:[#allocation12 + $0x98] sm:$0xff]
    %v129 = vld [vmem:[#allocation12 + $0xa0] sm:$0xff]
    %v130 = vld [vmem:[#allocation12 + $0xa8] sm:$0xff]
    %v131 = vld [vmem:[#allocation12 + $0xb0] sm:$0xff]
    %v132 = vld [vmem:[#allocation12 + $0xb8] sm:$0xff]
    %v133 = vld [vmem:[#allocation12 + $0xc0] sm:$0xff]
    %v134 = vld [vmem:[#allocation12 + $0xc8] sm:$0xff]
    %v135 = vld [vmem:[#allocation12 + $0xd0] sm:$0xff]
    %v136 = vld [vmem:[#allocation12 + $0xd8] sm:$0xff]
    %v137 = vld [vmem:[#allocation12 + $0xe0] sm:$0xff]
    %v138 = vld [vmem:[#allocation12 + $0xe8] sm:$0xff]
    %v139 = vld [vmem:[#allocation12 + $0xf0] sm:$0xff]
    %v140 = vld [vmem:[#allocation12 + $0xf8] sm:$0xff]
    %v141 = vld [vmem:[#allocation12 + $0x100] sm:$0xff]
    %v142 = vld [vmem:[#allocation12 + $0x108] sm:$0xff]
    %v143 = vld [vmem:[#allocation12 + $0x110] sm:$0xff]
    %v144 = vld [vmem:[#allocation12 + $0x118] sm:$0xff]
    %v145 = vld [vmem:[#allocation12 + $0x120] sm:$0xff]
    %v146 = vld [vmem:[#allocation12 + $0x128] sm:$0xff]
    %v147 = vld [vmem:[#allocation12 + $0x130] sm:$0xff]
    %v148 = vld [vmem:[#allocation12 + $0x138] sm:$0xff]
    %v149 = vld [vmem:[#allocation12 + $0x140] sm:$0xff]
    %v150 = vld [vmem:[#allocation12 + $0x148] sm:$0xff]
    %v151 = vld [vmem:[#allocation12 + $0x150] sm:$0xff]
    %v152 = vld [vmem:[#allocation12 + $0x158] sm:$0xff]
    %v153 = vld [vmem:[#allocation12 + $0x160] sm:$0xff]
    %v154 = vld [vmem:[#allocation12 + $0x168] sm:$0xff]
    %v155 = vld [vmem:[#allocation12 + $0x170] sm:$0xff]
    %v156 = vld [vmem:[#allocation12 + $0x178] sm:$0xff]
    %v157 = vld [vmem:[#allocation12 + $0x180] sm:$0xff]
    %v158 = vld [vmem:[#allocation12 + $0x188] sm:$0xff]
    %v159 = vld [vmem:[#allocation12 + $0x190] sm:$0xff]
    %v160 = vld [vmem:[#allocation12 + $0x198] sm:$0xff]
    %v161 = vld [vmem:[#allocation12 + $0x1a0] sm:$0xff]
    %v162 = vld [vmem:[#allocation12 + $0x1a8] sm:$0xff]
    %v163 = vld [vmem:[#allocation12 + $0x1b0] sm:$0xff]
    %v164 = vld [vmem:[#allocation12 + $0x1b8] sm:$0xff]
    %v165 = vld [vmem:[#allocation12 + $0x1c0] sm:$0xff]
    %v166 = vld [vmem:[#allocation12 + $0x1c8] sm:$0xff]
    %v167 = vld [vmem:[#allocation12 + $0x1d0] sm:$0xff]
    %v168 = vld [vmem:[#allocation12 + $0x1d8] sm:$0xff]
    %v169 = vld [vmem:[#allocation12 + $0x1e0] sm:$0xff]
    %v170 = vld [vmem:[#allocation12 + $0x1e8] sm:$0xff]
    %v171 = vld [vmem:[#allocation12 + $0x1f0] sm:$0xff]
    %v172 = vld [vmem:[#allocation12 + $0x1f8] sm:$0xff]
    %v173 = vld [vmem:[#allocation10] sm:$0x1]
    %v174 = vld [vmem:[#allocation2] sm:$0xff]
    %v175 = vld [vmem:[#allocation3] sm:$0xff]
    %v176 = vld [vmem:[#allocation4] sm:$0xff]
    %v177 = vld [vmem:[#allocation4 + $0x8] sm:$0xff]
    %v178 = vld [vmem:[#allocation4 + $0x10] sm:$0xff]
    %v179 = vld [vmem:[#allocation4 + $0x18] sm:$0xff]
    %v180 = vld [vmem:[#allocation7] sm:$0xff]
    %v182 = vlaneseq
    %v183 = vshrl.u32 %v182, 7
    %v184 = vsub.s32 0, %v183
    %v185 = vrot.slane %v173, %v184
    %187 = vmatprep.subr.mxu0 0.0
    %188 = vmatpush1.msra.mxu0 %v93
    %189 = vmatprep.subr.mxu0 0.0
    %190 = vmatpush1.msra.mxu0 %v94
    %191 = vmatprep.subr.mxu0 0.0
    %192 = vmatpush1.msra.mxu0 %v95
    %193 = vmatprep.subr.mxu0 0.0
    %194 = vmatpush1.msra.mxu0 %v96
    %195 = vmatprep.subr.mxu0 0.0
    %196 = vmatpush1.msra.mxu0 %v97
    %197 = vmatprep.subr.mxu0 0.0
    %198 = vmatpush1.msra.mxu0 %v98
    %199 = vmatprep.subr.mxu0 0.0
    %200 = vmatpush1.msra.mxu0 %v99
    %201 = vmatprep.subr.mxu0 0.0
    %202 = vmatpush1.msra.mxu0 %v100
    %203 = vmatprep.subr.mxu0 0.0
    %204 = vmatpush1.msra.mxu0 %v101
    %205 = vmatprep.subr.mxu0 0.0
    %206 = vmatpush1.msra.mxu0 %v102
    %207 = vmatprep.subr.mxu0 0.0
    %208 = vmatpush1.msra.mxu0 %v103
    %209 = vmatprep.subr.mxu0 0.0
    %210 = vmatpush1.msra.mxu0 %v104
    %211 = vmatprep.subr.mxu0 0.0
    %212 = vmatpush1.msra.mxu0 %v105
    %213 = vmatprep.subr.mxu0 0.0
    %214 = vmatpush1.msra.mxu0 %v106
    %215 = vmatprep.subr.mxu0 0.0
    %216 = vmatpush1.msra.mxu0 %v107
    %217 = vmatprep.subr.mxu0 0.0
    %218 = vmatpush1.msra.mxu0 %v108
    %219 = vmatprep.subr.mxu0 0.0
    %220 = vmatpush1.msra.mxu0 0.0
    %221 = vmatprep.subr.mxu0 0.0
    %222 = vmatpush1.msra.mxu0 0.0
    %223 = vmatprep.subr.mxu0 0.0
    %224 = vmatpush1.msra.mxu0 0.0
    %225 = vmatprep.subr.mxu0 0.0
    %226 = vmatpush1.msra.mxu0 0.0
    %227 = vmatprep.subr.mxu0 0.0
    %228 = vmatpush1.msra.mxu0 0.0
    %229 = vmatprep.subr.mxu0 0.0
    %230 = vmatpush1.msra.mxu0 0.0
    %231 = vmatprep.subr.mxu0 0.0
    %232 = vmatpush1.msra.mxu0 0.0
    %233 = vmatprep.subr.mxu0 0.0
    %234 = vmatpush1.msra.mxu0 0.0
    %235 = vmatprep.subr.mxu0 0.0
    %236 = vmatpush1.msra.mxu0 0.0
    %237 = vmatprep.subr.mxu0 0.0
    %238 = vmatpush1.msra.mxu0 0.0
    %239 = vmatprep.subr.mxu0 0.0
    %240 = vmatpush1.msra.mxu0 0.0
    %241 = vmatprep.subr.mxu0 0.0
    %242 = vmatpush1.msra.mxu0 0.0
    %243 = vmatprep.subr.mxu0 0.0
    %244 = vmatpush1.msra.mxu0 0.0
    %245 = vmatprep.subr.mxu0 0.0
    %246 = vmatpush1.msra.mxu0 0.0
    %247 = vmatprep.subr.mxu0 0.0
    %248 = vmatpush1.msra.mxu0 0.0
    %249 = vmatprep.subr.mxu0 0.0
    %250 = vmatpush1.msra.mxu0 0.0
    %251 = vmatprep.mubr.f32.mxu0 0.0
    %252 = vmatmul.mubr.f32.gmra.mrb[0].mxu0 %v175
    %v253 = vpop.f32.mrb[0].mxu0
    %v254 = vadd.f32 %v185, %v253
    %v255 = vpop.f32.mrb[0].mxu0
    %256 = vdwg.mxu0
    %v257 = vtanh.pop %v254
    %v258 = vsub.f32 %v175, %v257
    %260 = vset.pattern.permute.xlu0 0
    %261 = vperm.xlu0 %260, %v180
    %v262 = vpop.permute.xlu0 %261
    %v264 = vmul.f32 %v257, %v262
    %v265 = vadd.f32 %v258, %v264
    %266 = vmatprep.subr.mxu0 %v110
    %267 = vmatpush1.msra.mxu0 %v109
    %268 = vmatprep.subr.mxu0 %v114
    %269 = vmatpush1.msra.mxu0 %v113
    %270 = vmatprep.subr.mxu0 %v118
    %271 = vmatpush1.msra.mxu0 %v117
    %272 = vmatprep.subr.mxu0 %v122
    %273 = vmatpush1.msra.mxu0 %v121
    %274 = vmatprep.subr.mxu0 %v126
    %275 = vmatpush1.msra.mxu0 %v125
    %276 = vmatprep.subr.mxu0 %v130
    %277 = vmatpush1.msra.mxu0 %v129
    %278 = vmatprep.subr.mxu0 %v134
    %279 = vmatpush1.msra.mxu0 %v133
    %280 = vmatprep.subr.mxu0 %v138
    %281 = vmatpush1.msra.mxu0 %v137
    %282 = vmatprep.subr.mxu0 %v142
    %283 = vmatpush1.msra.mxu0 %v141
    %284 = vmatprep.subr.mxu0 %v146
    %285 = vmatpush1.msra.mxu0 %v145
    %286 = vmatprep.subr.mxu0 %v150
    %287 = vmatpush1.msra.mxu0 %v149
    %288 = vmatprep.subr.mxu0 %v154
    %289 = vmatpush1.msra.mxu0 %v153
    %290 = vmatprep.subr.mxu0 %v158
    %291 = vmatpush1.msra.mxu0 %v157
    %292 = vmatprep.subr.mxu0 %v162
    %293 = vmatpush1.msra.mxu0 %v161
    %294 = vmatprep.subr.mxu0 %v166
    %295 = vmatpush1.msra.mxu0 %v165
    %296 = vmatprep.subr.mxu0 %v170
    %297 = vmatpush1.msra.mxu0 %v169
    %298 = vmatprep.subr.mxu0 0.0
    %299 = vmatpush1.msra.mxu0 0.0
    %300 = vmatprep.subr.mxu0 0.0
    %301 = vmatpush1.msra.mxu0 0.0
    %302 = vmatprep.subr.mxu0 0.0
    %303 = vmatpush1.msra.mxu0 0.0
    %304 = vmatprep.subr.mxu0 0.0
    %305 = vmatpush1.msra.mxu0 0.0
    %306 = vmatprep.subr.mxu0 0.0
    %307 = vmatpush1.msra.mxu0 0.0
    %308 = vmatprep.subr.mxu0 0.0
    %309 = vmatpush1.msra.mxu0 0.0
    %310 = vmatprep.subr.mxu0 0.0
    %311 = vmatpush1.msra.mxu0 0.0
    %312 = vmatprep.subr.mxu0 0.0
    %313 = vmatpush1.msra.mxu0 0.0
    %314 = vmatprep.subr.mxu0 0.0
    %315 = vmatpush1.msra.mxu0 0.0
    %316 = vmatprep.subr.mxu0 0.0
    %317 = vmatpush1.msra.mxu0 0.0
    %318 = vmatprep.subr.mxu0 0.0
    %319 = vmatpush1.msra.mxu0 0.0
    %320 = vmatprep.subr.mxu0 0.0
    %321 = vmatpush1.msra.mxu0 0.0
    %322 = vmatprep.subr.mxu0 0.0
    %323 = vmatpush1.msra.mxu0 0.0
    %324 = vmatprep.subr.mxu0 0.0
    %325 = vmatpush1.msra.mxu0 0.0
    %326 = vmatprep.subr.mxu0 0.0
    %327 = vmatpush1.msra.mxu0 0.0
    %328 = vmatprep.subr.mxu0 0.0
    %329 = vmatpush1.msra.mxu0 0.0
    %330 = vmatprep.mubr.f32.mxu0 0.0
    %331 = vmatmul.mubr.f32.gmra.mrb[0].mxu0 %v174
    %v332 = vpop.f32.mrb[0].mxu0
    %v333 = vadd.f32 %v176, %v332
    %v334 = vpop.f32.mrb[0].mxu0
    %v335 = vadd.f32 %v177, %v334
    %336 = vdwg.mxu0
    %337 = vmatprep.subr.mxu0 %v112
    %338 = vmatpush1.msra.mxu0 %v111
    %339 = vmatprep.subr.mxu0 %v116
    %340 = vmatpush1.msra.mxu0 %v115
    %341 = vmatprep.subr.mxu0 %v120
    %342 = vmatpush1.msra.mxu0 %v119
    %343 = vmatprep.subr.mxu0 %v124
    %344 = vmatpush1.msra.mxu0 %v123
    %345 = vmatprep.subr.mxu0 %v128
    %346 = vmatpush1.msra.mxu0 %v127
    %347 = vmatprep.subr.mxu0 %v132
    %348 = vmatpush1.msra.mxu0 %v131
    %349 = vmatprep.subr.mxu0 %v136
    %350 = vmatpush1.msra.mxu0 %v135
    %351 = vmatprep.subr.mxu0 %v140
    %352 = vmatpush1.msra.mxu0 %v139
    %353 = vmatprep.subr.mxu0 %v144
    %354 = vmatpush1.msra.mxu0 %v143
    %355 = vmatprep.subr.mxu0 %v148
    %356 = vmatpush1.msra.mxu0 %v147
    %357 = vmatprep.subr.mxu0 %v152
    %358 = vmatpush1.msra.mxu0 %v151
    %359 = vmatprep.subr.mxu0 %v156
    %360 = vmatpush1.msra.mxu0 %v155
    %361 = vmatprep.subr.mxu0 %v160
    %362 = vmatpush1.msra.mxu0 %v159
    %363 = vmatprep.subr.mxu0 %v164
    %364 = vmatpush1.msra.mxu0 %v163
    %365 = vmatprep.subr.mxu0 %v168
    %366 = vmatpush1.msra.mxu0 %v167
    %367 = vmatprep.subr.mxu0 %v172
    %368 = vmatpush1.msra.mxu0 %v171
    %369 = vmatprep.subr.mxu0 0.0
    %370 = vmatpush1.msra.mxu0 0.0
    %371 = vmatprep.subr.mxu0 0.0
    %372 = vmatpush1.msra.mxu0 0.0
    %373 = vmatprep.subr.mxu0 0.0
    %374 = vmatpush1.msra.mxu0 0.0
    %375 = vmatprep.subr.mxu0 0.0
    %376 = vmatpush1.msra.mxu0 0.0
    %377 = vmatprep.subr.mxu0 0.0
    %378 = vmatpush1.msra.mxu0 0.0
    %379 = vmatprep.subr.mxu0 0.0
    %380 = vmatpush1.msra.mxu0 0.0
    %381 = vmatprep.subr.mxu0 0.0
    %382 = vmatpush1.msra.mxu0 0.0
    %383 = vmatprep.subr.mxu0 0.0
    %384 = vmatpush1.msra.mxu0 0.0
    %385 = vmatprep.subr.mxu0 0.0
    %386 = vmatpush1.msra.mxu0 0.0
    %387 = vmatprep.subr.mxu0 0.0
    %388 = vmatpush1.msra.mxu0 0.0
    %389 = vmatprep.subr.mxu0 0.0
    %390 = vmatpush1.msra.mxu0 0.0
    %391 = vmatprep.subr.mxu0 0.0
    %392 = vmatpush1.msra.mxu0 0.0
    %393 = vmatprep.subr.mxu0 0.0
    %394 = vmatpush1.msra.mxu0 0.0
    %395 = vmatprep.subr.mxu0 0.0
    %396 = vmatpush1.msra.mxu0 0.0
    %397 = vmatprep.subr.mxu0 0.0
    %398 = vmatpush1.msra.mxu0 0.0
    %399 = vmatprep.subr.mxu0 0.0
    %400 = vmatpush1.msra.mxu0 0.0
    %401 = vmatprep.mubr.f32.mxu0 0.0
    %402 = vmatmul.mubr.f32.gmra.mrb[0].mxu0 %v174
    %v403 = vpop.f32.mrb[0].mxu0
    %v404 = vadd.f32 %v178, %v403
    %v405 = vpop.f32.mrb[0].mxu0
    %v406 = vadd.f32 %v179, %v405
    %407 = vdwg.mxu0
    %v408 = vxor.u32 %v333, 2147483648
    %v409 = vmul.f32 %v408, 1.442695
    %v410 = vpow.pop %v409
    %v411 = vadd.f32 %v410, 1.0
    %v412 = vrcp.pop %v411
    %v413 = vmul.f32 1.0, %v412
    %v414 = vxor.u32 %v335, 2147483648
    %v415 = vmul.f32 %v414, 1.442695
    %v416 = vpow.pop %v415
    %v417 = vadd.f32 %v416, 1.0
    %v418 = vrcp.pop %v417
    %v419 = vmul.f32 1.0, %v418
    %v420 = vxor.u32 %v404, 2147483648
    %v421 = vmul.f32 %v420, 1.442695
    %v422 = vpow.pop %v421
    %v423 = vadd.f32 %v422, 1.0
    %v424 = vrcp.pop %v423
    %v425 = vmul.f32 1.0, %v424
    %v426 = vxor.u32 %v406, 2147483648
    %v427 = vmul.f32 %v426, 1.442695
    %v428 = vpow.pop %v427
    %v429 = vadd.f32 %v428, 1.0
    %v430 = vrcp.pop %v429
    %v431 = vmul.f32 1.0, %v430
    %v432 = vmul.f32 %v413, %v265
    %v433 = vmul.f32 %v419, %v431
    %v434 = vadd.f32 %v432, %v433
    %v435 = vtanh.pop %v434
    %v436 = vmul.f32 %v425, %v435
    %437 = vst [vmem:[#allocation13] sm:$0xff] %v436
    %s438 = scalar_lea.vmem [#allocation4], 32
    %v439 = vld [vmem:[%s438] sm:$0xff]
    %v440 = vld [vmem:[%s438 + $0x8] sm:$0xff]
    %v441 = vld [vmem:[%s438 + $0x10] sm:$0xff]
    %v442 = vld [vmem:[%s438 + $0x18] sm:$0xff]
    %s443 = scalar_lea.vmem [#allocation7], 8
    %v444 = vld [vmem:[%s443] sm:$0xff]
    %445 = vmatprep.subr.mxu0 0.0
    %446 = vmatpush1.msra.mxu0 %v93
    %447 = vmatprep.subr.mxu0 0.0
    %448 = vmatpush1.msra.mxu0 %v94
    %449 = vmatprep.subr.mxu0 0.0
    %450 = vmatpush1.msra.mxu0 %v95
    %451 = vmatprep.subr.mxu0 0.0
    %452 = vmatpush1.msra.mxu0 %v96
    %453 = vmatprep.subr.mxu0 0.0
    %454 = vmatpush1.msra.mxu0 %v97
    %455 = vmatprep.subr.mxu0 0.0
    %456 = vmatpush1.msra.mxu0 %v98
    %457 = vmatprep.subr.mxu0 0.0
    %458 = vmatpush1.msra.mxu0 %v99
    %459 = vmatprep.subr.mxu0 0.0
    %460 = vmatpush1.msra.mxu0 %v100
    %461 = vmatprep.subr.mxu0 0.0
    %462 = vmatpush1.msra.mxu0 %v101
    %463 = vmatprep.subr.mxu0 0.0
    %464 = vmatpush1.msra.mxu0 %v102
    %465 = vmatprep.subr.mxu0 0.0
    %466 = vmatpush1.msra.mxu0 %v103
    %467 = vmatprep.subr.mxu0 0.0
    %468 = vmatpush1.msra.mxu0 %v104
    %469 = vmatprep.subr.mxu0 0.0
    %470 = vmatpush1.msra.mxu0 %v105
    %471 = vmatprep.subr.mxu0 0.0
    %472 = vmatpush1.msra.mxu0 %v106
    %473 = vmatprep.subr.mxu0 0.0
    %474 = vmatpush1.msra.mxu0 %v107
    %475 = vmatprep.subr.mxu0 0.0
    %476 = vmatpush1.msra.mxu0 %v108
    %477 = vmatprep.subr.mxu0 0.0
    %478 = vmatpush1.msra.mxu0 0.0
    %479 = vmatprep.subr.mxu0 0.0
    %480 = vmatpush1.msra.mxu0 0.0
    %481 = vmatprep.subr.mxu0 0.0
    %482 = vmatpush1.msra.mxu0 0.0
    %483 = vmatprep.subr.mxu0 0.0
    %484 = vmatpush1.msra.mxu0 0.0
    %485 = vmatprep.subr.mxu0 0.0
    %486 = vmatpush1.msra.mxu0 0.0
    %487 = vmatprep.subr.mxu0 0.0
    %488 = vmatpush1.msra.mxu0 0.0
    %489 = vmatprep.subr.mxu0 0.0
    %490 = vmatpush1.msra.mxu0 0.0
    %491 = vmatprep.subr.mxu0 0.0
    %492 = vmatpush1.msra.mxu0 0.0
    %493 = vmatprep.subr.mxu0 0.0
    %494 = vmatpush1.msra.mxu0 0.0
    %495 = vmatprep.subr.mxu0 0.0
    %496 = vmatpush1.msra.mxu0 0.0
    %497 = vmatprep.subr.mxu0 0.0
    %498 = vmatpush1.msra.mxu0 0.0
    %499 = vmatprep.subr.mxu0 0.0
    %500 = vmatpush1.msra.mxu0 0.0
    %501 = vmatprep.subr.mxu0 0.0
    %502 = vmatpush1.msra.mxu0 0.0
    %503 = vmatprep.subr.mxu0 0.0
    %504 = vmatpush1.msra.mxu0 0.0
    %505 = vmatprep.subr.mxu0 0.0
    %506 = vmatpush1.msra.mxu0 0.0
    %507 = vmatprep.subr.mxu0 0.0
    %508 = vmatpush1.msra.mxu0 0.0
    %509 = vmatprep.mubr.f32.mxu0 0.0
    %510 = vmatmul.mubr.f32.gmra.mrb[0].mxu0 %v434
    %v511 = vpop.f32.mrb[0].mxu0
    %v512 = vadd.f32 %v185, %v511
    %v513 = vpop.f32.mrb[0].mxu0
    %514 = vdwg.mxu0
    %v515 = vtanh.pop %v512
    %v516 = vsub.f32 %v434, %v515
    %518 = vset.pattern.permute.xlu0 0
    %519 = vperm.xlu0 %518, %v444
    %v520 = vpop.permute.xlu0 %519
    %v522 = vmul.f32 %v515, %v520
    %v523 = vadd.f32 %v516, %v522
    %524 = vmatprep.subr.mxu0 %v110
    %525 = vmatpush1.msra.mxu0 %v109
    %526 = vmatprep.subr.mxu0 %v114
    %527 = vmatpush1.msra.mxu0 %v113
    %528 = vmatprep.subr.mxu0 %v118
    %529 = vmatpush1.msra.mxu0 %v117
    %530 = vmatprep.subr.mxu0 %v122
    %531 = vmatpush1.msra.mxu0 %v121
    %532 = vmatprep.subr.mxu0 %v126
    %533 = vmatpush1.msra.mxu0 %v125
    %534 = vmatprep.subr.mxu0 %v130
    %535 = vmatpush1.msra.mxu0 %v129
    %536 = vmatprep.subr.mxu0 %v134
    %537 = vmatpush1.msra.mxu0 %v133
    %538 = vmatprep.subr.mxu0 %v138
    %539 = vmatpush1.msra.mxu0 %v137
    %540 = vmatprep.subr.mxu0 %v142
    %541 = vmatpush1.msra.mxu0 %v141
    %542 = vmatprep.subr.mxu0 %v146
    %543 = vmatpush1.msra.mxu0 %v145
    %544 = vmatprep.subr.mxu0 %v150
    %545 = vmatpush1.msra.mxu0 %v149
    %546 = vmatprep.subr.mxu0 %v154
    %547 = vmatpush1.msra.mxu0 %v153
    %548 = vmatprep.subr.mxu0 %v158
    %549 = vmatpush1.msra.mxu0 %v157
    %550 = vmatprep.subr.mxu0 %v162
    %551 = vmatpush1.msra.mxu0 %v161
    %552 = vmatprep.subr.mxu0 %v166
    %553 = vmatpush1.msra.mxu0 %v165
    %554 = vmatprep.subr.mxu0 %v170
    %555 = vmatpush1.msra.mxu0 %v169
    %556 = vmatprep.subr.mxu0 0.0
    %557 = vmatpush1.msra.mxu0 0.0
    %558 = vmatprep.subr.mxu0 0.0
    %559 = vmatpush1.msra.mxu0 0.0
    %560 = vmatprep.subr.mxu0 0.0
    %561 = vmatpush1.msra.mxu0 0.0
    %562 = vmatprep.subr.mxu0 0.0
    %563 = vmatpush1.msra.mxu0 0.0
    %564 = vmatprep.subr.mxu0 0.0
    %565 = vmatpush1.msra.mxu0 0.0
    %566 = vmatprep.subr.mxu0 0.0
    %567 = vmatpush1.msra.mxu0 0.0
    %568 = vmatprep.subr.mxu0 0.0
    %569 = vmatpush1.msra.mxu0 0.0
    %570 = vmatprep.subr.mxu0 0.0
    %571 = vmatpush1.msra.mxu0 0.0
    %572 = vmatprep.subr.mxu0 0.0
    %573 = vmatpush1.msra.mxu0 0.0
    %574 = vmatprep.subr.mxu0 0.0
    %575 = vmatpush1.msra.mxu0 0.0
    %576 = vmatprep.subr.mxu0 0.0
    %577 = vmatpush1.msra.mxu0 0.0
    %578 = vmatprep.subr.mxu0 0.0
    %579 = vmatpush1.msra.mxu0 0.0
    %580 = vmatprep.subr.mxu0 0.0
    %581 = vmatpush1.msra.mxu0 0.0
    %582 = vmatprep.subr.mxu0 0.0
    %583 = vmatpush1.msra.mxu0 0.0
    %584 = vmatprep.subr.mxu0 0.0
    %585 = vmatpush1.msra.mxu0 0.0
    %586 = vmatprep.subr.mxu0 0.0
    %587 = vmatpush1.msra.mxu0 0.0
    %588 = vmatprep.mubr.f32.mxu0 0.0
    %589 = vmatmul.mubr.f32.gmra.mrb[0].mxu0 %v436
    %v590 = vpop.f32.mrb[0].mxu0
    %v591 = vadd.f32 %v439, %v590
    %v592 = vpop.f32.mrb[0].mxu0
    %v593 = vadd.f32 %v440, %v592
    %594 = vdwg.mxu0
    %595 = vmatprep.subr.mxu0 %v112
    %596 = vmatpush1.msra.mxu0 %v111
    %597 = vmatprep.subr.mxu0 %v116
    %598 = vmatpush1.msra.mxu0 %v115
    %599 = vmatprep.subr.mxu0 %v120
    %600 = vmatpush1.msra.mxu0 %v119
    %601 = vmatprep.subr.mxu0 %v124
    %602 = vmatpush1.msra.mxu0 %v123
    %603 = vmatprep.subr.mxu0 %v128
    %604 = vmatpush1.msra.mxu0 %v127
    %605 = vmatprep.subr.mxu0 %v132
    %606 = vmatpush1.msra.mxu0 %v131
    %607 = vmatprep.subr.mxu0 %v136
    %608 = vmatpush1.msra.mxu0 %v135
    %609 = vmatprep.subr.mxu0 %v140
    %610 = vmatpush1.msra.mxu0 %v139
    %611 = vmatprep.subr.mxu0 %v144
    %612 = vmatpush1.msra.mxu0 %v143
    %613 = vmatprep.subr.mxu0 %v148
    %614 = vmatpush1.msra.mxu0 %v147
    %615 = vmatprep.subr.mxu0 %v152
    %616 = vmatpush1.msra.mxu0 %v151
    %617 = vmatprep.subr.mxu0 %v156
    %618 = vmatpush1.msra.mxu0 %v155
    %619 = vmatprep.subr.mxu0 %v160
    %620 = vmatpush1.msra.mxu0 %v159
    %621 = vmatprep.subr.mxu0 %v164
    %622 = vmatpush1.msra.mxu0 %v163
    %623 = vmatprep.subr.mxu0 %v168
    %624 = vmatpush1.msra.mxu0 %v167
    %625 = vmatprep.subr.mxu0 %v172
    %626 = vmatpush1.msra.mxu0 %v171
    %627 = vmatprep.subr.mxu0 0.0
    %628 = vmatpush1.msra.mxu0 0.0
    %629 = vmatprep.subr.mxu0 0.0
    %630 = vmatpush1.msra.mxu0 0.0
    %631 = vmatprep.subr.mxu0 0.0
    %632 = vmatpush1.msra.mxu0 0.0
    %633 = vmatprep.subr.mxu0 0.0
    %634 = vmatpush1.msra.mxu0 0.0
    %635 = vmatprep.subr.mxu0 0.0
    %636 = vmatpush1.msra.mxu0 0.0
    %637 = vmatprep.subr.mxu0 0.0
    %638 = vmatpush1.msra.mxu0 0.0
    %639 = vmatprep.subr.mxu0 0.0
    %640 = vmatpush1.msra.mxu0 0.0
    %641 = vmatprep.subr.mxu0 0.0
    %642 = vmatpush1.msra.mxu0 0.0
    %643 = vmatprep.subr.mxu0 0.0
    %644 = vmatpush1.msra.mxu0 0.0
    %645 = vmatprep.subr.mxu0 0.0
    %646 = vmatpush1.msra.mxu0 0.0
    %647 = vmatprep.subr.mxu0 0.0
    %648 = vmatpush1.msra.mxu0 0.0
    %649 = vmatprep.subr.mxu0 0.0
    %650 = vmatpush1.msra.mxu0 0.0
    %651 = vmatprep.subr.mxu0 0.0
    %652 = vmatpush1.msra.mxu0 0.0
    %653 = vmatprep.subr.mxu0 0.0
    %654 = vmatpush1.msra.mxu0 0.0
    %655 = vmatprep.subr.mxu0 0.0
    %656 = vmatpush1.msra.mxu0 0.0
    %657 = vmatprep.subr.mxu0 0.0
    %658 = vmatpush1.msra.mxu0 0.0
    %659 = vmatprep.mubr.f32.mxu0 0.0
    %660 = vmatmul.mubr.f32.gmra.mrb[0].mxu0 %v436
    %v661 = vpop.f32.mrb[0].mxu0
    %v662 = vadd.f32 %v441, %v661
    %v663 = vpop.f32.mrb[0].mxu0
    %v664 = vadd.f32 %v442, %v663
    %665 = vdwg.mxu0
    %v666 = vxor.u32 %v591, 2147483648
    %v667 = vmul.f32 %v666, 1.442695
    %v668 = vpow.pop %v667
    %v669 = vadd.f32 %v668, 1.0
    %v670 = vrcp.pop %v669
    %v671 = vmul.f32 1.0, %v670
    %v672 = vxor.u32 %v593, 2147483648
    %v673 = vmul.f32 %v672, 1.442695
    %v674 = vpow.pop %v673
    %v675 = vadd.f32 %v674, 1.0
    %v676 = vrcp.pop %v675
    %v677 = vmul.f32 1.0, %v676
    %v678 = vxor.u32 %v662, 2147483648
    %v679 = vmul.f32 %v678, 1.442695
    %v680 = vpow.pop %v679
    %v681 = vadd.f32 %v680, 1.0
    %v682 = vrcp.pop %v681
    %v683 = vmul.f32 1.0, %v682
    %v684 = vxor.u32 %v664, 2147483648
    %v685 = vmul.f32 %v684, 1.442695
    %v686 = vpow.pop %v685
    %v687 = vadd.f32 %v686, 1.0
    %v688 = vrcp.pop %v687
    %v689 = vmul.f32 1.0, %v688
    %v690 = vmul.f32 %v671, %v523
    %v691 = vmul.f32 %v677, %v689
    %v692 = vadd.f32 %v690, %v691
    %v693 = vtanh.pop %v692
    %v694 = vmul.f32 %v683, %v693
    %s695 = scalar_lea.vmem [#allocation13], 8
    %696 = vst [vmem:[%s695] sm:$0xff] %v694
    %s697 = scalar_lea.vmem [#allocation4], 64
    %v698 = vld [vmem:[%s697] sm:$0xff]
    %v699 = vld [vmem:[%s697 + $0x8] sm:$0xff]
    %v700 = vld [vmem:[%s697 + $0x10] sm:$0xff]
    %v701 = vld [vmem:[%s697 + $0x18] sm:$0xff]
    %s702 = scalar_lea.vmem [#allocation7], 16
    %v703 = vld [vmem:[%s702] sm:$0xff]
    %704 = vmatprep.subr.mxu0 0.0
    %705 = vmatpush1.msra.mxu0 %v93
    %706 = vmatprep.subr.mxu0 0.0
    %707 = vmatpush1.msra.mxu0 %v94
    %708 = vmatprep.subr.mxu0 0.0
    %709 = vmatpush1.msra.mxu0 %v95
    %710 = vmatprep.subr.mxu0 0.0
    %711 = vmatpush1.msra.mxu0 %v96
    %712 = vmatprep.subr.mxu0 0.0
    %713 = vmatpush1.msra.mxu0 %v97
    %714 = vmatprep.subr.mxu0 0.0
    %715 = vmatpush1.msra.mxu0 %v98
    %716 = vmatprep.subr.mxu0 0.0
    %717 = vmatpush1.msra.mxu0 %v99
    %718 = vmatprep.subr.mxu0 0.0
    %719 = vmatpush1.msra.mxu0 %v100
    %720 = vmatprep.subr.mxu0 0.0
    %721 = vmatpush1.msra.mxu0 %v101
    %722 = vmatprep.subr.mxu0 0.0
    %723 = vmatpush1.msra.mxu0 %v102
    %724 = vmatprep.subr.mxu0 0.0
    %725 = vmatpush1.msra.mxu0 %v103
    %726 = vmatprep.subr.mxu0 0.0
    %727 = vmatpush1.msra.mxu0 %v104
    %728 = vmatprep.subr.mxu0 0.0
    %729 = vmatpush1.msra.mxu0 %v105
    %730 = vmatprep.subr.mxu0 0.0
    %731 = vmatpush1.msra.mxu0 %v106
    %732 = vmatprep.subr.mxu0 0.0
    %733 = vmatpush1.msra.mxu0 %v107
    %734 = vmatprep.subr.mxu0 0.0
    %735 = vmatpush1.msra.mxu0 %v108
    %736 = vmatprep.subr.mxu0 0.0
    %737 = vmatpush1.msra.mxu0 0.0
    %738 = vmatprep.subr.mxu0 0.0
    %739 = vmatpush1.msra.mxu0 0.0
    %740 = vmatprep.subr.mxu0 0.0
    %741 = vmatpush1.msra.mxu0 0.0
    %742 = vmatprep.subr.mxu0 0.0
    %743 = vmatpush1.msra.mxu0 0.0
    %744 = vmatprep.subr.mxu0 0.0
    %745 = vmatpush1.msra.mxu0 0.0
    %746 = vmatprep.subr.mxu0 0.0
    %747 = vmatpush1.msra.mxu0 0.0
    %748 = vmatprep.subr.mxu0 0.0
    %749 = vmatpush1.msra.mxu0 0.0
    %750 = vmatprep.subr.mxu0 0.0
    %751 = vmatpush1.msra.mxu0 0.0
    %752 = vmatprep.subr.mxu0 0.0
    %753 = vmatpush1.msra.mxu0 0.0
    %754 = vmatprep.subr.mxu0 0.0
    %755 = vmatpush1.msra.mxu0 0.0
    %756 = vmatprep.subr.mxu0 0.0
    %757 = vmatpush1.msra.mxu0 0.0
    %758 = vmatprep.subr.mxu0 0.0
    %759 = vmatpush1.msra.mxu0 0.0
    %760 = vmatprep.subr.mxu0 0.0
    %761 = vmatpush1.msra.mxu0 0.0
    %762 = vmatprep.subr.mxu0 0.0
    %763 = vmatpush1.msra.mxu0 0.0
    %764 = vmatprep.subr.mxu0 0.0
    %765 = vmatpush1.msra.mxu0 0.0
    %766 = vmatprep.subr.mxu0 0.0
    %767 = vmatpush1.msra.mxu0 0.0
    %768 = vmatprep.mubr.f32.mxu0 0.0
    %769 = vmatmul.mubr.f32.gmra.mrb[0].mxu0 %v692
    %v770 = vpop.f32.mrb[0].mxu0
    %v771 = vadd.f32 %v185, %v770
    %v772 = vpop.f32.mrb[0].mxu0
    %773 = vdwg.mxu0
    %v774 = vtanh.pop %v771
    %v775 = vsub.f32 %v692, %v774
    %777 = vset.pattern.permute.xlu0 0
    %778 = vperm.xlu0 %777, %v703
    %v779 = vpop.permute.xlu0 %778
    %v781 = vmul.f32 %v774, %v779
    %v782 = vadd.f32 %v775, %v781
    %783 = vmatprep.subr.mxu0 %v110
    %784 = vmatpush1.msra.mxu0 %v109
    %785 = vmatprep.subr.mxu0 %v114
    %786 = vmatpush1.msra.mxu0 %v113
    %787 = vmatprep.subr.mxu0 %v118
    %788 = vmatpush1.msra.mxu0 %v117
    %789 = vmatprep.subr.mxu0 %v122
    %790 = vmatpush1.msra.mxu0 %v121
    %791 = vmatprep.subr.mxu0 %v126
    %792 = vmatpush1.msra.mxu0 %v125
    %793 = vmatprep.subr.mxu0 %v130
    %794 = vmatpush1.msra.mxu0 %v129
    %795 = vmatprep.subr.mxu0 %v134
    %796 = vmatpush1.msra.mxu0 %v133
    %797 = vmatprep.subr.mxu0 %v138
    %798 = vmatpush1.msra.mxu0 %v137
    %799 = vmatprep.subr.mxu0 %v142
    %800 = vmatpush1.msra.mxu0 %v141
    %801 = vmatprep.subr.mxu0 %v146
    %802 = vmatpush1.msra.mxu0 %v145
    %803 = vmatprep.subr.mxu0 %v150
    %804 = vmatpush1.msra.mxu0 %v149
    %805 = vmatprep.subr.mxu0 %v154
    %806 = vmatpush1.msra.mxu0 %v153
    %807 = vmatprep.subr.mxu0 %v158
    %808 = vmatpush1.msra.mxu0 %v157
    %809 = vmatprep.subr.mxu0 %v162
    %810 = vmatpush1.msra.mxu0 %v161
    %811 = vmatprep.subr.mxu0 %v166
    %812 = vmatpush1.msra.mxu0 %v165
    %813 = vmatprep.subr.mxu0 %v170
    %814 = vmatpush1.msra.mxu0 %v169
    %815 = vmatprep.subr.mxu0 0.0
    %816 = vmatpush1.msra.mxu0 0.0
    %817 = vmatprep.subr.mxu0 0.0
    %818 = vmatpush1.msra.mxu0 0.0
    %819 = vmatprep.subr.mxu0 0.0
    %820 = vmatpush1.msra.mxu0 0.0
    %821 = vmatprep.subr.mxu0 0.0
    %822 = vmatpush1.msra.mxu0 0.0
    %823 = vmatprep.subr.mxu0 0.0
    %824 = vmatpush1.msra.mxu0 0.0
    %825 = vmatprep.subr.mxu0 0.0
    %826 = vmatpush1.msra.mxu0 0.0
    %827 = vmatprep.subr.mxu0 0.0
    %828 = vmatpush1.msra.mxu0 0.0
    %829 = vmatprep.subr.mxu0 0.0
    %830 = vmatpush1.msra.mxu0 0.0
    %831 = vmatprep.subr.mxu0 0.0
    %832 = vmatpush1.msra.mxu0 0.0
    %833 = vmatprep.subr.mxu0 0.0
    %834 = vmatpush1.msra.mxu0 0.0
    %835 = vmatprep.subr.mxu0 0.0
    %836 = vmatpush1.msra.mxu0 0.0
    %837 = vmatprep.subr.mxu0 0.0
    %838 = vmatpush1.msra.mxu0 0.0
    %839 = vmatprep.subr.mxu0 0.0
    %840 = vmatpush1.msra.mxu0 0.0
    %841 = vmatprep.subr.mxu0 0.0
    %842 = vmatpush1.msra.mxu0 0.0
    %843 = vmatprep.subr.mxu0 0.0
    %844 = vmatpush1.msra.mxu0 0.0
    %845 = vmatprep.subr.mxu0 0.0
    %846 = vmatpush1.msra.mxu0 0.0
    %847 = vmatprep.mubr.f32.mxu0 0.0
    %848 = vmatmul.mubr.f32.gmra.mrb[0].mxu0 %v694
    %v849 = vpop.f32.mrb[0].mxu0
    %v850 = vadd.f32 %v698, %v849
    %v851 = vpop.f32.mrb[0].mxu0
    %v852 = vadd.f32 %v699, %v851
    %853 = vdwg.mxu0
    %854 = vmatprep.subr.mxu0 %v112
    %855 = vmatpush1.msra.mxu0 %v111
    %856 = vmatprep.subr.mxu0 %v116
    %857 = vmatpush1.msra.mxu0 %v115
    %858 = vmatprep.subr.mxu0 %v120
    %859 = vmatpush1.msra.mxu0 %v119
    %860 = vmatprep.subr.mxu0 %v124
    %861 = vmatpush1.msra.mxu0 %v123
    %862 = vmatprep.subr.mxu0 %v128
    %863 = vmatpush1.msra.mxu0 %v127
    %864 = vmatprep.subr.mxu0 %v132
    %865 = vmatpush1.msra.mxu0 %v131
    %866 = vmatprep.subr.mxu0 %v136
    %867 = vmatpush1.msra.mxu0 %v135
    %868 = vmatprep.subr.mxu0 %v140
    %869 = vmatpush1.msra.mxu0 %v139
    %870 = vmatprep.subr.mxu0 %v144
    %871 = vmatpush1.msra.mxu0 %v143
    %872 = vmatprep.subr.mxu0 %v148
    %873 = vmatpush1.msra.mxu0 %v147
    %874 = vmatprep.subr.mxu0 %v152
    %875 = vmatpush1.msra.mxu0 %v151
    %876 = vmatprep.subr.mxu0 %v156
    %877 = vmatpush1.msra.mxu0 %v155
    %878 = vmatprep.subr.mxu0 %v160
    %879 = vmatpush1.msra.mxu0 %v159
    %880 = vmatprep.subr.mxu0 %v164
    %881 = vmatpush1.msra.mxu0 %v163
    %882 = vmatprep.subr.mxu0 %v168
    %883 = vmatpush1.msra.mxu0 %v167
    %884 = vmatprep.subr.mxu0 %v172
    %885 = vmatpush1.msra.mxu0 %v171
    %886 = vmatprep.subr.mxu0 0.0
    %887 = vmatpush1.msra.mxu0 0.0
    %888 = vmatprep.subr.mxu0 0.0
    %889 = vmatpush1.msra.mxu0 0.0
    %890 = vmatprep.subr.mxu0 0.0
    %891 = vmatpush1.msra.mxu0 0.0
    %892 = vmatprep.subr.mxu0 0.0
    %893 = vmatpush1.msra.mxu0 0.0
    %894 = vmatprep.subr.mxu0 0.0
    %895 = vmatpush1.msra.mxu0 0.0
    %896 = vmatprep.subr.mxu0 0.0
    %897 = vmatpush1.msra.mxu0 0.0
    %898 = vmatprep.subr.mxu0 0.0
    %899 = vmatpush1.msra.mxu0 0.0
    %900 = vmatprep.subr.mxu0 0.0
    %901 = vmatpush1.msra.mxu0 0.0
    %902 = vmatprep.subr.mxu0 0.0
    %903 = vmatpush1.msra.mxu0 0.0
    %904 = vmatprep.subr.mxu0 0.0
    %905 = vmatpush1.msra.mxu0 0.0
    %906 = vmatprep.subr.mxu0 0.0
    %907 = vmatpush1.msra.mxu0 0.0
    %908 = vmatprep.subr.mxu0 0.0
    %909 = vmatpush1.msra.mxu0 0.0
    %910 = vmatprep.subr.mxu0 0.0
    %911 = vmatpush1.msra.mxu0 0.0
    %912 = vmatprep.subr.mxu0 0.0
    %913 = vmatpush1.msra.mxu0 0.0
    %914 = vmatprep.subr.mxu0 0.0
    %915 = vmatpush1.msra.mxu0 0.0
    %916 = vmatprep.subr.mxu0 0.0
    %917 = vmatpush1.msra.mxu0 0.0
    %918 = vmatprep.mubr.f32.mxu0 0.0
    %919 = vmatmul.mubr.f32.gmra.mrb[0].mxu0 %v694
    %v920 = vpop.f32.mrb[0].mxu0
    %v921 = vadd.f32 %v700, %v920
    %v922 = vpop.f32.mrb[0].mxu0
    %v923 = vadd.f32 %v701, %v922
    %924 = vdwg.mxu0
    %v925 = vxor.u32 %v850, 2147483648
    %v926 = vmul.f32 %v925, 1.442695
    %v927 = vpow.pop %v926
    %v928 = vadd.f32 %v927, 1.0
    %v929 = vrcp.pop %v928
    %v930 = vmul.f32 1.0, %v929
    %v931 = vxor.u32 %v852, 2147483648
    %v932 = vmul.f32 %v931, 1.442695
    %v933 = vpow.pop %v932
    %v934 = vadd.f32 %v933, 1.0
    %v935 = vrcp.pop %v934
    %v936 = vmul.f32 1.0, %v935
    %v937 = vxor.u32 %v921, 2147483648
    %v938 = vmul.f32 %v937, 1.442695
    %v939 = vpow.pop %v938
    %v940 = vadd.f32 %v939, 1.0
    %v941 = vrcp.pop %v940
    %v942 = vmul.f32 1.0, %v941
    %v943 = vxor.u32 %v923, 2147483648
    %v944 = vmul.f32 %v943, 1.442695
    %v945 = vpow.pop %v944
    %v946 = vadd.f32 %v945, 1.0
    %v947 = vrcp.pop %v946
    %v948 = vmul.f32 1.0, %v947
    %v949 = vmul.f32 %v930, %v782
    %v950 = vmul.f32 %v936, %v948
    %v951 = vadd.f32 %v949, %v950
    %v952 = vtanh.pop %v951
    %v953 = vmul.f32 %v942, %v952
    %s954 = scalar_lea.vmem [#allocation13], 16
    %955 = vst [vmem:[%s954] sm:$0xff] %v953
    %s956 = scalar_lea.vmem [#allocation4], 96
    %v957 = vld [vmem:[%s956] sm:$0xff]
    %v958 = vld [vmem:[%s956 + $0x8] sm:$0xff]
    %v959 = vld [vmem:[%s956 + $0x10] sm:$0xff]
    %v960 = vld [vmem:[%s956 + $0x18] sm:$0xff]
    %s961 = scalar_lea.vmem [#allocation7], 24
    %v962 = vld [vmem:[%s961] sm:$0xff]
    %963 = vmatprep.subr.mxu0 0.0
    %964 = vmatpush1.msra.mxu0 %v93
    %965 = vmatprep.subr.mxu0 0.0
    %966 = vmatpush1.msra.mxu0 %v94
    %967 = vmatprep.subr.mxu0 0.0
    %968 = vmatpush1.msra.mxu0 %v95
    %969 = vmatprep.subr.mxu0 0.0
    %970 = vmatpush1.msra.mxu0 %v96
    %971 = vmatprep.subr.mxu0 0.0
    %972 = vmatpush1.msra.mxu0 %v97
    %973 = vmatprep.subr.mxu0 0.0
    %974 = vmatpush1.msra.mxu0 %v98
    %975 = vmatprep.subr.mxu0 0.0
    %976 = vmatpush1.msra.mxu0 %v99
    %977 = vmatprep.subr.mxu0 0.0
    %978 = vmatpush1.msra.mxu0 %v100
    %979 = vmatprep.subr.mxu0 0.0
    %980 = vmatpush1.msra.mxu0 %v101
    %981 = vmatprep.subr.mxu0 0.0
    %982 = vmatpush1.msra.mxu0 %v102
    %983 = vmatprep.subr.mxu0 0.0
    %984 = vmatpush1.msra.mxu0 %v103
    %985 = vmatprep.subr.mxu0 0.0
    %986 = vmatpush1.msra.mxu0 %v104
    %987 = vmatprep.subr.mxu0 0.0
    %988 = vmatpush1.msra.mxu0 %v105
    %989 = vmatprep.subr.mxu0 0.0
    %990 = vmatpush1.msra.mxu0 %v106
    %991 = vmatprep.subr.mxu0 0.0
    %992 = vmatpush1.msra.mxu0 %v107
    %993 = vmatprep.subr.mxu0 0.0
    %994 = vmatpush1.msra.mxu0 %v108
    %995 = vmatprep.subr.mxu0 0.0
    %996 = vmatpush1.msra.mxu0 0.0
    %997 = vmatprep.subr.mxu0 0.0
    %998 = vmatpush1.msra.mxu0 0.0
    %999 = vmatprep.subr.mxu0 0.0
    %1000 = vmatpush1.msra.mxu0 0.0
    %1001 = vmatprep.subr.mxu0 0.0
    %1002 = vmatpush1.msra.mxu0 0.0
    %1003 = vmatprep.subr.mxu0 0.0
    %1004 = vmatpush1.msra.mxu0 0.0
    %1005 = vmatprep.subr.mxu0 0.0
    %1006 = vmatpush1.msra.mxu0 0.0
    %1007 = vmatprep.subr.mxu0 0.0
    %1008 = vmatpush1.msra.mxu0 0.0
    %1009 = vmatprep.subr.mxu0 0.0
    %1010 = vmatpush1.msra.mxu0 0.0
    %1011 = vmatprep.subr.mxu0 0.0
    %1012 = vmatpush1.msra.mxu0 0.0
    %1013 = vmatprep.subr.mxu0 0.0
    %1014 = vmatpush1.msra.mxu0 0.0
    %1015 = vmatprep.subr.mxu0 0.0
    %1016 = vmatpush1.msra.mxu0 0.0
    %1017 = vmatprep.subr.mxu0 0.0
    %1018 = vmatpush1.msra.mxu0 0.0
    %1019 = vmatprep.subr.mxu0 0.0
    %1020 = vmatpush1.msra.mxu0 0.0
    %1021 = vmatprep.subr.mxu0 0.0
    %1022 = vmatpush1.msra.mxu0 0.0
    %1023 = vmatprep.subr.mxu0 0.0
    %1024 = vmatpush1.msra.mxu0 0.0
    %1025 = vmatprep.subr.mxu0 0.0
    %1026 = vmatpush1.msra.mxu0 0.0
    %1027 = vmatprep.mubr.f32.mxu0 0.0
    %1028 = vmatmul.mubr.f32.gmra.mrb[0].mxu0 %v951
    %v1029 = vpop.f32.mrb[0].mxu0
    %v1030 = vadd.f32 %v185, %v1029
    %v1031 = vpop.f32.mrb[0].mxu0
    %1032 = vdwg.mxu0
    %v1033 = vtanh.pop %v1030
    %v1034 = vsub.f32 %v951, %v1033
    %1036 = vset.pattern.permute.xlu0 0
    %1037 = vperm.xlu0 %1036, %v962
    %v1038 = vpop.permute.xlu0 %1037
    %v1040 = vmul.f32 %v1033, %v1038
    %v1041 = vadd.f32 %v1034, %v1040
    %1042 = vmatprep.subr.mxu0 %v110
    %1043 = vmatpush1.msra.mxu0 %v109
    %1044 = vmatprep.subr.mxu0 %v114
    %1045 = vmatpush1.msra.mxu0 %v113
    %1046 = vmatprep.subr.mxu0 %v118
    %1047 = vmatpush1.msra.mxu0 %v117
    %1048 = vmatprep.subr.mxu0 %v122
    %1049 = vmatpush1.msra.mxu0 %v121
    %1050 = vmatprep.subr.mxu0 %v126
    %1051 = vmatpush1.msra.mxu0 %v125
    %1052 = vmatprep.subr.mxu0 %v130
    %1053 = vmatpush1.msra.mxu0 %v129
    %1054 = vmatprep.subr.mxu0 %v134
    %1055 = vmatpush1.msra.mxu0 %v133
    %1056 = vmatprep.subr.mxu0 %v138
    %1057 = vmatpush1.msra.mxu0 %v137
    %1058 = vmatprep.subr.mxu0 %v142
    %1059 = vmatpush1.msra.mxu0 %v141
    %1060 = vmatprep.subr.mxu0 %v146
    %1061 = vmatpush1.msra.mxu0 %v145
    %1062 = vmatprep.subr.mxu0 %v150
    %1063 = vmatpush1.msra.mxu0 %v149
    %1064 = vmatprep.subr.mxu0 %v154
    %1065 = vmatpush1.msra.mxu0 %v153
    %1066 = vmatprep.subr.mxu0 %v158
    %1067 = vmatpush1.msra.mxu0 %v157
    %1068 = vmatprep.subr.mxu0 %v162
    %1069 = vmatpush1.msra.mxu0 %v161
    %1070 = vmatprep.subr.mxu0 %v166
    %1071 = vmatpush1.msra.mxu0 %v165
    %1072 = vmatprep.subr.mxu0 %v170
    %1073 = vmatpush1.msra.mxu0 %v169
    %1074 = vmatprep.subr.mxu0 0.0
    %1075 = vmatpush1.msra.mxu0 0.0
    %1076 = vmatprep.subr.mxu0 0.0
    %1077 = vmatpush1.msra.mxu0 0.0
    %1078 = vmatprep.subr.mxu0 0.0
    %1079 = vmatpush1.msra.mxu0 0.0
    %1080 = vmatprep.subr.mxu0 0.0
    %1081 = vmatpush1.msra.mxu0 0.0
    %1082 = vmatprep.subr.mxu0 0.0
    %1083 = vmatpush1.msra.mxu0 0.0
    %1084 = vmatprep.subr.mxu0 0.0
    %1085 = vmatpush1.msra.mxu0 0.0
    %1086 = vmatprep.subr.mxu0 0.0
    %1087 = vmatpush1.msra.mxu0 0.0
    %1088 = vmatprep.subr.mxu0 0.0
    %1089 = vmatpush1.msra.mxu0 0.0
    %1090 = vmatprep.subr.mxu0 0.0
    %1091 = vmatpush1.msra.mxu0 0.0
    %1092 = vmatprep.subr.mxu0 0.0
    %1093 = vmatpush1.msra.mxu0 0.0
    %1094 = vmatprep.subr.mxu0 0.0
    %1095 = vmatpush1.msra.mxu0 0.0
    %1096 = vmatprep.subr.mxu0 0.0
    %1097 = vmatpush1.msra.mxu0 0.0
    %1098 = vmatprep.subr.mxu0 0.0
    %1099 = vmatpush1.msra.mxu0 0.0
    %1100 = vmatprep.subr.mxu0 0.0
    %1101 = vmatpush1.msra.mxu0 0.0
    %1102 = vmatprep.subr.mxu0 0.0
    %1103 = vmatpush1.msra.mxu0 0.0
    %1104 = vmatprep.subr.mxu0 0.0
    %1105 = vmatpush1.msra.mxu0 0.0
    %1106 = vmatprep.mubr.f32.mxu0 0.0
    %1107 = vmatmul.mubr.f32.gmra.mrb[0].mxu0 %v953
    %v1108 = vpop.f32.mrb[0].mxu0
    %v1109 = vadd.f32 %v957, %v1108
    %v1110 = vpop.f32.mrb[0].mxu0
    %v1111 = vadd.f32 %v958, %v1110
    %1112 = vdwg.mxu0
    %1113 = vmatprep.subr.mxu0 %v112
    %1114 = vmatpush1.msra.mxu0 %v111
    %1115 = vmatprep.subr.mxu0 %v116
    %1116 = vmatpush1.msra.mxu0 %v115
    %1117 = vmatprep.subr.mxu0 %v120
    %1118 = vmatpush1.msra.mxu0 %v119
    %1119 = vmatprep.subr.mxu0 %v124
    %1120 = vmatpush1.msra.mxu0 %v123
    %1121 = vmatprep.subr.mxu0 %v128
    %1122 = vmatpush1.msra.mxu0 %v127
    %1123 = vmatprep.subr.mxu0 %v132
    %1124 = vmatpush1.msra.mxu0 %v131
    %1125 = vmatprep.subr.mxu0 %v136
    %1126 = vmatpush1.msra.mxu0 %v135
    %1127 = vmatprep.subr.mxu0 %v140
    %1128 = vmatpush1.msra.mxu0 %v139
    %1129 = vmatprep.subr.mxu0 %v144
    %1130 = vmatpush1.msra.mxu0 %v143
    %1131 = vmatprep.subr.mxu0 %v148
    %1132 = vmatpush1.msra.mxu0 %v147
    %1133 = vmatprep.subr.mxu0 %v152
    %1134 = vmatpush1.msra.mxu0 %v151
    %1135 = vmatprep.subr.mxu0 %v156
    %1136 = vmatpush1.msra.mxu0 %v155
    %1137 = vmatprep.subr.mxu0 %v160
    %1138 = vmatpush1.msra.mxu0 %v159
    %1139 = vmatprep.subr.mxu0 %v164
    %1140 = vmatpush1.msra.mxu0 %v163
    %1141 = vmatprep.subr.mxu0 %v168
    %1142 = vmatpush1.msra.mxu0 %v167
    %1143 = vmatprep.subr.mxu0 %v172
    %1144 = vmatpush1.msra.mxu0 %v171
    %1145 = vmatprep.subr.mxu0 0.0
    %1146 = vmatpush1.msra.mxu0 0.0
    %1147 = vmatprep.subr.mxu0 0.0
    %1148 = vmatpush1.msra.mxu0 0.0
    %1149 = vmatprep.subr.mxu0 0.0
    %1150 = vmatpush1.msra.mxu0 0.0
    %1151 = vmatprep.subr.mxu0 0.0
    %1152 = vmatpush1.msra.mxu0 0.0
    %1153 = vmatprep.subr.mxu0 0.0
    %1154 = vmatpush1.msra.mxu0 0.0
    %1155 = vmatprep.subr.mxu0 0.0
    %1156 = vmatpush1.msra.mxu0 0.0
    %1157 = vmatprep.subr.mxu0 0.0
    %1158 = vmatpush1.msra.mxu0 0.0
    %1159 = vmatprep.subr.mxu0 0.0
    %1160 = vmatpush1.msra.mxu0 0.0
    %1161 = vmatprep.subr.mxu0 0.0
    %1162 = vmatpush1.msra.mxu0 0.0
    %1163 = vmatprep.subr.mxu0 0.0
    %1164 = vmatpush1.msra.mxu0 0.0
    %1165 = vmatprep.subr.mxu0 0.0
    %1166 = vmatpush1.msra.mxu0 0.0
    %1167 = vmatprep.subr.mxu0 0.0
    %1168 = vmatpush1.msra.mxu0 0.0
    %1169 = vmatprep.subr.mxu0 0.0
    %1170 = vmatpush1.msra.mxu0 0.0
    %1171 = vmatprep.subr.mxu0 0.0
    %1172 = vmatpush1.msra.mxu0 0.0
    %1173 = vmatprep.subr.mxu0 0.0
    %1174 = vmatpush1.msra.mxu0 0.0
    %1175 = vmatprep.subr.mxu0 0.0
    %1176 = vmatpush1.msra.mxu0 0.0
    %1177 = vmatprep.mubr.f32.mxu0 0.0
    %1178 = vmatmul.mubr.f32.gmra.mrb[0].mxu0 %v953
    %v1179 = vpop.f32.mrb[0].mxu0
    %v1180 = vadd.f32 %v959, %v1179
    %v1181 = vpop.f32.mrb[0].mxu0
    %v1182 = vadd.f32 %v960, %v1181
    %1183 = vdwg.mxu0
    %v1184 = vxor.u32 %v1109, 2147483648
    %v1185 = vmul.f32 %v1184, 1.442695
    %v1186 = vpow.pop %v1185
    %v1187 = vadd.f32 %v1186, 1.0
    %v1188 = vrcp.pop %v1187
    %v1189 = vmul.f32 1.0, %v1188
    %v1190 = vxor.u32 %v1111, 2147483648
    %v1191 = vmul.f32 %v1190, 1.442695
    %v1192 = vpow.pop %v1191
    %v1193 = vadd.f32 %v1192, 1.0
    %v1194 = vrcp.pop %v1193
    %v1195 = vmul.f32 1.0, %v1194
    %v1196 = vxor.u32 %v1180, 2147483648
    %v1197 = vmul.f32 %v1196, 1.442695
    %v1198 = vpow.pop %v1197
    %v1199 = vadd.f32 %v1198, 1.0
    %v1200 = vrcp.pop %v1199
    %v1201 = vmul.f32 1.0, %v1200
    %v1202 = vxor.u32 %v1182, 2147483648
    %v1203 = vmul.f32 %v1202, 1.442695
    %v1204 = vpow.pop %v1203
    %v1205 = vadd.f32 %v1204, 1.0
    %v1206 = vrcp.pop %v1205
    %v1207 = vmul.f32 1.0, %v1206
    %v1208 = vmul.f32 %v1189, %v1041
    %v1209 = vmul.f32 %v1195, %v1207
    %v1210 = vadd.f32 %v1208, %v1209
    %v1211 = vtanh.pop %v1210
    %v1212 = vmul.f32 %v1201, %v1211
    %s1213 = scalar_lea.vmem [#allocation13], 24
    %1214 = vst [vmem:[%s1213] sm:$0xff] %v1212
    %s1215 = scalar_lea.vmem [#allocation4], 128
    %v1216 = vld [vmem:[%s1215] sm:$0xff]
    %v1217 = vld [vmem:[%s1215 + $0x8] sm:$0xff]
    %v1218 = vld [vmem:[%s1215 + $0x10] sm:$0xff]
    %v1219 = vld [vmem:[%s1215 + $0x18] sm:$0xff]
    %s1220 = scalar_lea.vmem [#allocation7], 32
    %v1221 = vld [vmem:[%s1220] sm:$0xff]
    %1222 = vmatprep.subr.mxu0 0.0
    %1223 = vmatpush1.msra.mxu0 %v93
    %1224 = vmatprep.subr.mxu0 0.0
    %1225 = vmatpush1.msra.mxu0 %v94
    %1226 = vmatprep.subr.mxu0 0.0
    %1227 = vmatpush1.msra.mxu0 %v95
    %1228 = vmatprep.subr.mxu0 0.0
    %1229 = vmatpush1.msra.mxu0 %v96
    %1230 = vmatprep.subr.mxu0 0.0
    %1231 = vmatpush1.msra.mxu0 %v97
    %1232 = vmatprep.subr.mxu0 0.0
    %1233 = vmatpush1.msra.mxu0 %v98
    %1234 = vmatprep.subr.mxu0 0.0
    %1235 = vmatpush1.msra.mxu0 %v99
    %1236 = vmatprep.subr.mxu0 0.0
    %1237 = vmatpush1.msra.mxu0 %v100
    %1238 = vmatprep.subr.mxu0 0.0
    %1239 = vmatpush1.msra.mxu0 %v101
    %1240 = vmatprep.subr.mxu0 0.0
    %1241 = vmatpush1.msra.mxu0 %v102
    %1242 = vmatprep.subr.mxu0 0.0
    %1243 = vmatpush1.msra.mxu0 %v103
    %1244 = vmatprep.subr.mxu0 0.0
    %1245 = vmatpush1.msra.mxu0 %v104
    %1246 = vmatprep.subr.mxu0 0.0
    %1247 = vmatpush1.msra.mxu0 %v105
    %1248 = vmatprep.subr.mxu0 0.0
    %1249 = vmatpush1.msra.mxu0 %v106
    %1250 = vmatprep.subr.mxu0 0.0
    %1251 = vmatpush1.msra.mxu0 %v107
    %1252 = vmatprep.subr.mxu0 0.0
    %1253 = vmatpush1.msra.mxu0 %v108
    %1254 = vmatprep.subr.mxu0 0.0
    %1255 = vmatpush1.msra.mxu0 0.0
    %1256 = vmatprep.subr.mxu0 0.0
    %1257 = vmatpush1.msra.mxu0 0.0
    %1258 = vmatprep.subr.mxu0 0.0
    %1259 = vmatpush1.msra.mxu0 0.0
    %1260 = vmatprep.subr.mxu0 0.0
    %1261 = vmatpush1.msra.mxu0 0.0
    %1262 = vmatprep.subr.mxu0 0.0
    %1263 = vmatpush1.msra.mxu0 0.0
    %1264 = vmatprep.subr.mxu0 0.0
    %1265 = vmatpush1.msra.mxu0 0.0
    %1266 = vmatprep.subr.mxu0 0.0
    %1267 = vmatpush1.msra.mxu0 0.0
    %1268 = vmatprep.subr.mxu0 0.0
    %1269 = vmatpush1.msra.mxu0 0.0
    %1270 = vmatprep.subr.mxu0 0.0
    %1271 = vmatpush1.msra.mxu0 0.0
    %1272 = vmatprep.subr.mxu0 0.0
    %1273 = vmatpush1.msra.mxu0 0.0
    %1274 = vmatprep.subr.mxu0 0.0
    %1275 = vmatpush1.msra.mxu0 0.0
    %1276 = vmatprep.subr.mxu0 0.0
    %1277 = vmatpush1.msra.mxu0 0.0
    %1278 = vmatprep.subr.mxu0 0.0
    %1279 = vmatpush1.msra.mxu0 0.0
    %1280 = vmatprep.subr.mxu0 0.0
    %1281 = vmatpush1.msra.mxu0 0.0
    %1282 = vmatprep.subr.mxu0 0.0
    %1283 = vmatpush1.msra.mxu0 0.0
    %1284 = vmatprep.subr.mxu0 0.0
    %1285 = vmatpush1.msra.mxu0 0.0
    %1286 = vmatprep.mubr.f32.mxu0 0.0
    %1287 = vmatmul.mubr.f32.gmra.mrb[0].mxu0 %v1210
    %v1288 = vpop.f32.mrb[0].mxu0
    %v1289 = vadd.f32 %v185, %v1288
    %v1290 = vpop.f32.mrb[0].mxu0
    %1291 = vdwg.mxu0
    %v1292 = vtanh.pop %v1289
    %v1293 = vsub.f32 %v1210, %v1292
    %1295 = vset.pattern.permute.xlu0 0
    %1296 = vperm.xlu0 %1295, %v1221
    %v1297 = vpop.permute.xlu0 %1296
    %v1299 = vmul.f32 %v1292, %v1297
    %v1300 = vadd.f32 %v1293, %v1299
    %1301 = vmatprep.subr.mxu0 %v110
    %1302 = vmatpush1.msra.mxu0 %v109
    %1303 = vmatprep.subr.mxu0 %v114
    %1304 = vmatpush1.msra.mxu0 %v113
    %1305 = vmatprep.subr.mxu0 %v118
    %1306 = vmatpush1.msra.mxu0 %v117
    %1307 = vmatprep.subr.mxu0 %v122
    %1308 = vmatpush1.msra.mxu0 %v121
    %1309 = vmatprep.subr.mxu0 %v126
    %1310 = vmatpush1.msra.mxu0 %v125
    %1311 = vmatprep.subr.mxu0 %v130
    %1312 = vmatpush1.msra.mxu0 %v129
    %1313 = vmatprep.subr.mxu0 %v134
    %1314 = vmatpush1.msra.mxu0 %v133
    %1315 = vmatprep.subr.mxu0 %v138
    %1316 = vmatpush1.msra.mxu0 %v137
    %1317 = vmatprep.subr.mxu0 %v142
    %1318 = vmatpush1.msra.mxu0 %v141
    %1319 = vmatprep.subr.mxu0 %v146
    %1320 = vmatpush1.msra.mxu0 %v145
    %1321 = vmatprep.subr.mxu0 %v150
    %1322 = vmatpush1.msra.mxu0 %v149
    %1323 = vmatprep.subr.mxu0 %v154
    %1324 = vmatpush1.msra.mxu0 %v153
    %1325 = vmatprep.subr.mxu0 %v158
    %1326 = vmatpush1.msra.mxu0 %v157
    %1327 = vmatprep.subr.mxu0 %v162
    %1328 = vmatpush1.msra.mxu0 %v161
    %1329 = vmatprep.subr.mxu0 %v166
    %1330 = vmatpush1.msra.mxu0 %v165
    %1331 = vmatprep.subr.mxu0 %v170
    %1332 = vmatpush1.msra.mxu0 %v169
    %1333 = vmatprep.subr.mxu0 0.0
    %1334 = vmatpush1.msra.mxu0 0.0
    %1335 = vmatprep.subr.mxu0 0.0
    %1336 = vmatpush1.msra.mxu0 0.0
    %1337 = vmatprep.subr.mxu0 0.0
    %1338 = vmatpush1.msra.mxu0 0.0
    %1339 = vmatprep.subr.mxu0 0.0
    %1340 = vmatpush1.msra.mxu0 0.0
    %1341 = vmatprep.subr.mxu0 0.0
    %1342 = vmatpush1.msra.mxu0 0.0
    %1343 = vmatprep.subr.mxu0 0.0
    %1344 = vmatpush1.msra.mxu0 0.0
    %1345 = vmatprep.subr.mxu0 0.0
    %1346 = vmatpush1.msra.mxu0 0.0
    %1347 = vmatprep.subr.mxu0 0.0
    %1348 = vmatpush1.msra.mxu0 0.0
    %1349 = vmatprep.subr.mxu0 0.0
    %1350 = vmatpush1.msra.mxu0 0.0
    %1351 = vmatprep.subr.mxu0 0.0
    %1352 = vmatpush1.msra.mxu0 0.0
    %1353 = vmatprep.subr.mxu0 0.0
    %1354 = vmatpush1.msra.mxu0 0.0
    %1355 = vmatprep.subr.mxu0 0.0
    %1356 = vmatpush1.msra.mxu0 0.0
    %1357 = vmatprep.subr.mxu0 0.0
    %1358 = vmatpush1.msra.mxu0 0.0
    %1359 = vmatprep.subr.mxu0 0.0
    %1360 = vmatpush1.msra.mxu0 0.0
    %1361 = vmatprep.subr.mxu0 0.0
    %1362 = vmatpush1.msra.mxu0 0.0
    %1363 = vmatprep.subr.mxu0 0.0
    %1364 = vmatpush1.msra.mxu0 0.0
    %1365 = vmatprep.mubr.f32.mxu0 0.0
    %1366 = vmatmul.mubr.f32.gmra.mrb[0].mxu0 %v1212
    %v1367 = vpop.f32.mrb[0].mxu0
    %v1368 = vadd.f32 %v1216, %v1367
    %v1369 = vpop.f32.mrb[0].mxu0
    %v1370 = vadd.f32 %v1217, %v1369
    %1371 = vdwg.mxu0
    %1372 = vmatprep.subr.mxu0 %v112
    %1373 = vmatpush1.msra.mxu0 %v111
    %1374 = vmatprep.subr.mxu0 %v116
    %1375 = vmatpush1.msra.mxu0 %v115
    %1376 = vmatprep.subr.mxu0 %v120
    %1377 = vmatpush1.msra.mxu0 %v119
    %1378 = vmatprep.subr.mxu0 %v124
    %1379 = vmatpush1.msra.mxu0 %v123
    %1380 = vmatprep.subr.mxu0 %v128
    %1381 = vmatpush1.msra.mxu0 %v127
    %1382 = vmatprep.subr.mxu0 %v132
    %1383 = vmatpush1.msra.mxu0 %v131
    %1384 = vmatprep.subr.mxu0 %v136
    %1385 = vmatpush1.msra.mxu0 %v135
    %1386 = vmatprep.subr.mxu0 %v140
    %1387 = vmatpush1.msra.mxu0 %v139
    %1388 = vmatprep.subr.mxu0 %v144
    %1389 = vmatpush1.msra.mxu0 %v143
    %1390 = vmatprep.subr.mxu0 %v148
    %1391 = vmatpush1.msra.mxu0 %v147
    %1392 = vmatprep.subr.mxu0 %v152
    %1393 = vmatpush1.msra.mxu0 %v151
    %1394 = vmatprep.subr.mxu0 %v156
    %1395 = vmatpush1.msra.mxu0 %v155
    %1396 = vmatprep.subr.mxu0 %v160
    %1397 = vmatpush1.msra.mxu0 %v159
    %1398 = vmatprep.subr.mxu0 %v164
    %1399 = vmatpush1.msra.mxu0 %v163
    %1400 = vmatprep.subr.mxu0 %v168
    %1401 = vmatpush1.msra.mxu0 %v167
    %1402 = vmatprep.subr.mxu0 %v172
    %1403 = vmatpush1.msra.mxu0 %v171
    %1404 = vmatprep.subr.mxu0 0.0
    %1405 = vmatpush1.msra.mxu0 0.0
    %1406 = vmatprep.subr.mxu0 0.0
    %1407 = vmatpush1.msra.mxu0 0.0
    %1408 = vmatprep.subr.mxu0 0.0
    %1409 = vmatpush1.msra.mxu0 0.0
    %1410 = vmatprep.subr.mxu0 0.0
    %1411 = vmatpush1.msra.mxu0 0.0
    %1412 = vmatprep.subr.mxu0 0.0
    %1413 = vmatpush1.msra.mxu0 0.0
    %1414 = vmatprep.subr.mxu0 0.0
    %1415 = vmatpush1.msra.mxu0 0.0
    %1416 = vmatprep.subr.mxu0 0.0
    %1417 = vmatpush1.msra.mxu0 0.0
    %1418 = vmatprep.subr.mxu0 0.0
    %1419 = vmatpush1.msra.mxu0 0.0
    %1420 = vmatprep.subr.mxu0 0.0
    %1421 = vmatpush1.msra.mxu0 0.0
    %1422 = vmatprep.subr.mxu0 0.0
    %1423 = vmatpush1.msra.mxu0 0.0
    %1424 = vmatprep.subr.mxu0 0.0
    %1425 = vmatpush1.msra.mxu0 0.0
    %1426 = vmatprep.subr.mxu0 0.0
    %1427 = vmatpush1.msra.mxu0 0.0
    %1428 = vmatprep.subr.mxu0 0.0
    %1429 = vmatpush1.msra.mxu0 0.0
    %1430 = vmatprep.subr.mxu0 0.0
    %1431 = vmatpush1.msra.mxu0 0.0
    %1432 = vmatprep.subr.mxu0 0.0
    %1433 = vmatpush1.msra.mxu0 0.0
    %1434 = vmatprep.subr.mxu0 0.0
    %1435 = vmatpush1.msra.mxu0 0.0
    %1436 = vmatprep.mubr.f32.mxu0 0.0
    %1437 = vmatmul.mubr.f32.gmra.mrb[0].mxu0 %v1212
    %v1438 = vpop.f32.mrb[0].mxu0
    %v1439 = vadd.f32 %v1218, %v1438
    %v1440 = vpop.f32.mrb[0].mxu0
    %v1441 = vadd.f32 %v1219, %v1440
    %1442 = vdwg.mxu0
    %v1443 = vxor.u32 %v1368, 2147483648
    %v1444 = vmul.f32 %v1443, 1.442695
    %v1445 = vpow.pop %v1444
    %v1446 = vadd.f32 %v1445, 1.0
    %v1447 = vrcp.pop %v1446
    %v1448 = vmul.f32 1.0, %v1447
    %v1449 = vxor.u32 %v1370, 2147483648
    %v1450 = vmul.f32 %v1449, 1.442695
    %v1451 = vpow.pop %v1450
    %v1452 = vadd.f32 %v1451, 1.0
    %v1453 = vrcp.pop %v1452
    %v1454 = vmul.f32 1.0, %v1453
    %v1455 = vxor.u32 %v1439, 2147483648
    %v1456 = vmul.f32 %v1455, 1.442695
    %v1457 = vpow.pop %v1456
    %v1458 = vadd.f32 %v1457, 1.0
    %v1459 = vrcp.pop %v1458
    %v1460 = vmul.f32 1.0, %v1459
    %v1461 = vxor.u32 %v1441, 2147483648
    %v1462 = vmul.f32 %v1461, 1.442695
    %v1463 = vpow.pop %v1462
    %v1464 = vadd.f32 %v1463, 1.0
    %v1465 = vrcp.pop %v1464
    %v1466 = vmul.f32 1.0, %v1465
    %v1467 = vmul.f32 %v1448, %v1300
    %v1468 = vmul.f32 %v1454, %v1466
    %v1469 = vadd.f32 %v1467, %v1468
    %v1470 = vtanh.pop %v1469
    %v1471 = vmul.f32 %v1460, %v1470
    %s1472 = scalar_lea.vmem [#allocation13], 32
    %1473 = vst [vmem:[%s1472] sm:$0xff] %v1471
    %s1474 = scalar_lea.vmem [#allocation4], 160
    %v1475 = vld [vmem:[%s1474] sm:$0xff]
    %v1476 = vld [vmem:[%s1474 + $0x8] sm:$0xff]
    %v1477 = vld [vmem:[%s1474 + $0x10] sm:$0xff]
    %v1478 = vld [vmem:[%s1474 + $0x18] sm:$0xff]
    %s1479 = scalar_lea.vmem [#allocation7], 40
    %v1480 = vld [vmem:[%s1479] sm:$0xff]
    %1481 = vmatprep.subr.mxu0 0.0
    %1482 = vmatpush1.msra.mxu0 %v93
    %1483 = vmatprep.subr.mxu0 0.0
    %1484 = vmatpush1.msra.mxu0 %v94
    %1485 = vmatprep.subr.mxu0 0.0
    %1486 = vmatpush1.msra.mxu0 %v95
    %1487 = vmatprep.subr.mxu0 0.0
    %1488 = vmatpush1.msra.mxu0 %v96
    %1489 = vmatprep.subr.mxu0 0.0
    %1490 = vmatpush1.msra.mxu0 %v97
    %1491 = vmatprep.subr.mxu0 0.0
    %1492 = vmatpush1.msra.mxu0 %v98
    %1493 = vmatprep.subr.mxu0 0.0
    %1494 = vmatpush1.msra.mxu0 %v99
    %1495 = vmatprep.subr.mxu0 0.0
    %1496 = vmatpush1.msra.mxu0 %v100
    %1497 = vmatprep.subr.mxu0 0.0
    %1498 = vmatpush1.msra.mxu0 %v101
    %1499 = vmatprep.subr.mxu0 0.0
    %1500 = vmatpush1.msra.mxu0 %v102
    %1501 = vmatprep.subr.mxu0 0.0
    %1502 = vmatpush1.msra.mxu0 %v103
    %1503 = vmatprep.subr.mxu0 0.0
    %1504 = vmatpush1.msra.mxu0 %v104
    %1505 = vmatprep.subr.mxu0 0.0
    %1506 = vmatpush1.msra.mxu0 %v105
    %1507 = vmatprep.subr.mxu0 0.0
    %1508 = vmatpush1.msra.mxu0 %v106
    %1509 = vmatprep.subr.mxu0 0.0
    %1510 = vmatpush1.msra.mxu0 %v107
    %1511 = vmatprep.subr.mxu0 0.0
    %1512 = vmatpush1.msra.mxu0 %v108
    %1513 = vmatprep.subr.mxu0 0.0
    %1514 = vmatpush1.msra.mxu0 0.0
    %1515 = vmatprep.subr.mxu0 0.0
    %1516 = vmatpush1.msra.mxu0 0.0
    %1517 = vmatprep.subr.mxu0 0.0
    %1518 = vmatpush1.msra.mxu0 0.0
    %1519 = vmatprep.subr.mxu0 0.0
    %1520 = vmatpush1.msra.mxu0 0.0
    %1521 = vmatprep.subr.mxu0 0.0
    %1522 = vmatpush1.msra.mxu0 0.0
    %1523 = vmatprep.subr.mxu0 0.0
    %1524 = vmatpush1.msra.mxu0 0.0
    %1525 = vmatprep.subr.mxu0 0.0
    %1526 = vmatpush1.msra.mxu0 0.0
    %1527 = vmatprep.subr.mxu0 0.0
    %1528 = vmatpush1.msra.mxu0 0.0
    %1529 = vmatprep.subr.mxu0 0.0
    %1530 = vmatpush1.msra.mxu0 0.0
    %1531 = vmatprep.subr.mxu0 0.0
    %1532 = vmatpush1.msra.mxu0 0.0
    %1533 = vmatprep.subr.mxu0 0.0
    %1534 = vmatpush1.msra.mxu0 0.0
    %1535 = vmatprep.subr.mxu0 0.0
    %1536 = vmatpush1.msra.mxu0 0.0
    %1537 = vmatprep.subr.mxu0 0.0
    %1538 = vmatpush1.msra.mxu0 0.0
    %1539 = vmatprep.subr.mxu0 0.0
    %1540 = vmatpush1.msra.mxu0 0.0
    %1541 = vmatprep.subr.mxu0 0.0
    %1542 = vmatpush1.msra.mxu0 0.0
    %1543 = vmatprep.subr.mxu0 0.0
    %1544 = vmatpush1.msra.mxu0 0.0
    %1545 = vmatprep.mubr.f32.mxu0 0.0
    %1546 = vmatmul.mubr.f32.gmra.mrb[0].mxu0 %v1469
    %v1547 = vpop.f32.mrb[0].mxu0
    %v1548 = vadd.f32 %v185, %v1547
    %v1549 = vpop.f32.mrb[0].mxu0
    %1550 = vdwg.mxu0
    %v1551 = vtanh.pop %v1548
    %v1552 = vsub.f32 %v1469, %v1551
    %1554 = vset.pattern.permute.xlu0 0
    %1555 = vperm.xlu0 %1554, %v1480
    %v1556 = vpop.permute.xlu0 %1555
    %v1558 = vmul.f32 %v1551, %v1556
    %v1559 = vadd.f32 %v1552, %v1558
    %1560 = vmatprep.subr.mxu0 %v110
    %1561 = vmatpush1.msra.mxu0 %v109
    %1562 = vmatprep.subr.mxu0 %v114
    %1563 = vmatpush1.msra.mxu0 %v113
    %1564 = vmatprep.subr.mxu0 %v118
    %1565 = vmatpush1.msra.mxu0 %v117
    %1566 = vmatprep.subr.mxu0 %v122
    %1567 = vmatpush1.msra.mxu0 %v121
    %1568 = vmatprep.subr.mxu0 %v126
    %1569 = vmatpush1.msra.mxu0 %v125
    %1570 = vmatprep.subr.mxu0 %v130
    %1571 = vmatpush1.msra.mxu0 %v129
    %1572 = vmatprep.subr.mxu0 %v134
    %1573 = vmatpush1.msra.mxu0 %v133
    %1574 = vmatprep.subr.mxu0 %v138
    %1575 = vmatpush1.msra.mxu0 %v137
    %1576 = vmatprep.subr.mxu0 %v142
    %1577 = vmatpush1.msra.mxu0 %v141
    %1578 = vmatprep.subr.mxu0 %v146
    %1579 = vmatpush1.msra.mxu0 %v145
    %1580 = vmatprep.subr.mxu0 %v150
    %1581 = vmatpush1.msra.mxu0 %v149
    %1582 = vmatprep.subr.mxu0 %v154
    %1583 = vmatpush1.msra.mxu0 %v153
    %1584 = vmatprep.subr.mxu0 %v158
    %1585 = vmatpush1.msra.mxu0 %v157
    %1586 = vmatprep.subr.mxu0 %v162
    %1587 = vmatpush1.msra.mxu0 %v161
    %1588 = vmatprep.subr.mxu0 %v166
    %1589 = vmatpush1.msra.mxu0 %v165
    %1590 = vmatprep.subr.mxu0 %v170
    %1591 = vmatpush1.msra.mxu0 %v169
    %1592 = vmatprep.subr.mxu0 0.0
    %1593 = vmatpush1.msra.mxu0 0.0
    %1594 = vmatprep.subr.mxu0 0.0
    %1595 = vmatpush1.msra.mxu0 0.0
    %1596 = vmatprep.subr.mxu0 0.0
    %1597 = vmatpush1.msra.mxu0 0.0
    %1598 = vmatprep.subr.mxu0 0.0
    %1599 = vmatpush1.msra.mxu0 0.0
    %1600 = vmatprep.subr.mxu0 0.0
    %1601 = vmatpush1.msra.mxu0 0.0
    %1602 = vmatprep.subr.mxu0 0.0
    %1603 = vmatpush1.msra.mxu0 0.0
    %1604 = vmatprep.subr.mxu0 0.0
    %1605 = vmatpush1.msra.mxu0 0.0
    %1606 = vmatprep.subr.mxu0 0.0
    %1607 = vmatpush1.msra.mxu0 0.0
    %1608 = vmatprep.subr.mxu0 0.0
    %1609 = vmatpush1.msra.mxu0 0.0
    %1610 = vmatprep.subr.mxu0 0.0
    %1611 = vmatpush1.msra.mxu0 0.0
    %1612 = vmatprep.subr.mxu0 0.0
    %1613 = vmatpush1.msra.mxu0 0.0
    %1614 = vmatprep.subr.mxu0 0.0
    %1615 = vmatpush1.msra.mxu0 0.0
    %1616 = vmatprep.subr.mxu0 0.0
    %1617 = vmatpush1.msra.mxu0 0.0
    %1618 = vmatprep.subr.mxu0 0.0
    %1619 = vmatpush1.msra.mxu0 0.0
    %1620 = vmatprep.subr.mxu0 0.0
    %1621 = vmatpush1.msra.mxu0 0.0
    %1622 = vmatprep.subr.mxu0 0.0
    %1623 = vmatpush1.msra.mxu0 0.0
    %1624 = vmatprep.mubr.f32.mxu0 0.0
    %1625 = vmatmul.mubr.f32.gmra.mrb[0].mxu0 %v1471
    %v1626 = vpop.f32.mrb[0].mxu0
    %v1627 = vadd.f32 %v1475, %v1626
    %v1628 = vpop.f32.mrb[0].mxu0
    %v1629 = vadd.f32 %v1476, %v1628
    %1630 = vdwg.mxu0
    %1631 = vmatprep.subr.mxu0 %v112
    %1632 = vmatpush1.msra.mxu0 %v111
    %1633 = vmatprep.subr.mxu0 %v116
    %1634 = vmatpush1.msra.mxu0 %v115
    %1635 = vmatprep.subr.mxu0 %v120
    %1636 = vmatpush1.msra.mxu0 %v119
    %1637 = vmatprep.subr.mxu0 %v124
    %1638 = vmatpush1.msra.mxu0 %v123
    %1639 = vmatprep.subr.mxu0 %v128
    %1640 = vmatpush1.msra.mxu0 %v127
    %1641 = vmatprep.subr.mxu0 %v132
    %1642 = vmatpush1.msra.mxu0 %v131
    %1643 = vmatprep.subr.mxu0 %v136
    %1644 = vmatpush1.msra.mxu0 %v135
    %1645 = vmatprep.subr.mxu0 %v140
    %1646 = vmatpush1.msra.mxu0 %v139
    %1647 = vmatprep.subr.mxu0 %v144
    %1648 = vmatpush1.msra.mxu0 %v143
    %1649 = vmatprep.subr.mxu0 %v148
    %1650 = vmatpush1.msra.mxu0 %v147
    %1651 = vmatprep.subr.mxu0 %v152
    %1652 = vmatpush1.msra.mxu0 %v151
    %1653 = vmatprep.subr.mxu0 %v156
    %1654 = vmatpush1.msra.mxu0 %v155
    %1655 = vmatprep.subr.mxu0 %v160
    %1656 = vmatpush1.msra.mxu0 %v159
    %1657 = vmatprep.subr.mxu0 %v164
    %1658 = vmatpush1.msra.mxu0 %v163
    %1659 = vmatprep.subr.mxu0 %v168
    %1660 = vmatpush1.msra.mxu0 %v167
    %1661 = vmatprep.subr.mxu0 %v172
    %1662 = vmatpush1.msra.mxu0 %v171
    %1663 = vmatprep.subr.mxu0 0.0
    %1664 = vmatpush1.msra.mxu0 0.0
    %1665 = vmatprep.subr.mxu0 0.0
    %1666 = vmatpush1.msra.mxu0 0.0
    %1667 = vmatprep.subr.mxu0 0.0
    %1668 = vmatpush1.msra.mxu0 0.0
    %1669 = vmatprep.subr.mxu0 0.0
    %1670 = vmatpush1.msra.mxu0 0.0
    %1671 = vmatprep.subr.mxu0 0.0
    %1672 = vmatpush1.msra.mxu0 0.0
    %1673 = vmatprep.subr.mxu0 0.0
    %1674 = vmatpush1.msra.mxu0 0.0
    %1675 = vmatprep.subr.mxu0 0.0
    %1676 = vmatpush1.msra.mxu0 0.0
    %1677 = vmatprep.subr.mxu0 0.0
    %1678 = vmatpush1.msra.mxu0 0.0
    %1679 = vmatprep.subr.mxu0 0.0
    %1680 = vmatpush1.msra.mxu0 0.0
    %1681 = vmatprep.subr.mxu0 0.0
    %1682 = vmatpush1.msra.mxu0 0.0
    %1683 = vmatprep.subr.mxu0 0.0
    %1684 = vmatpush1.msra.mxu0 0.0
    %1685 = vmatprep.subr.mxu0 0.0
    %1686 = vmatpush1.msra.mxu0 0.0
    %1687 = vmatprep.subr.mxu0 0.0
    %1688 = vmatpush1.msra.mxu0 0.0
    %1689 = vmatprep.subr.mxu0 0.0
    %1690 = vmatpush1.msra.mxu0 0.0
    %1691 = vmatprep.subr.mxu0 0.0
    %1692 = vmatpush1.msra.mxu0 0.0
    %1693 = vmatprep.subr.mxu0 0.0
    %1694 = vmatpush1.msra.mxu0 0.0
    %1695 = vmatprep.mubr.f32.mxu0 0.0
    %1696 = vmatmul.mubr.f32.gmra.mrb[0].mxu0 %v1471
    %v1697 = vpop.f32.mrb[0].mxu0
    %v1698 = vadd.f32 %v1477, %v1697
    %v1699 = vpop.f32.mrb[0].mxu0
    %v1700 = vadd.f32 %v1478, %v1699
    %1701 = vdwg.mxu0
    %v1702 = vxor.u32 %v1627, 2147483648
    %v1703 = vmul.f32 %v1702, 1.442695
    %v1704 = vpow.pop %v1703
    %v1705 = vadd.f32 %v1704, 1.0
    %v1706 = vrcp.pop %v1705
    %v1707 = vmul.f32 1.0, %v1706
    %v1708 = vxor.u32 %v1629, 2147483648
    %v1709 = vmul.f32 %v1708, 1.442695
    %v1710 = vpow.pop %v1709
    %v1711 = vadd.f32 %v1710, 1.0
    %v1712 = vrcp.pop %v1711
    %v1713 = vmul.f32 1.0, %v1712
    %v1714 = vxor.u32 %v1698, 2147483648
    %v1715 = vmul.f32 %v1714, 1.442695
    %v1716 = vpow.pop %v1715
    %v1717 = vadd.f32 %v1716, 1.0
    %v1718 = vrcp.pop %v1717
    %v1719 = vmul.f32 1.0, %v1718
    %v1720 = vxor.u32 %v1700, 2147483648
    %v1721 = vmul.f32 %v1720, 1.442695
    %v1722 = vpow.pop %v1721
    %v1723 = vadd.f32 %v1722, 1.0
    %v1724 = vrcp.pop %v1723
    %v1725 = vmul.f32 1.0, %v1724
    %v1726 = vmul.f32 %v1707, %v1559
    %v1727 = vmul.f32 %v1713, %v1725
    %v1728 = vadd.f32 %v1726, %v1727
    %v1729 = vtanh.pop %v1728
    %v1730 = vmul.f32 %v1719, %v1729
    %s1731 = scalar_lea.vmem [#allocation13], 40
    %1732 = vst [vmem:[%s1731] sm:$0xff] %v1730
    %s1733 = scalar_lea.vmem [#allocation4], 192
    %v1734 = vld [vmem:[%s1733] sm:$0xff]
    %v1735 = vld [vmem:[%s1733 + $0x8] sm:$0xff]
    %v1736 = vld [vmem:[%s1733 + $0x10] sm:$0xff]
    %v1737 = vld [vmem:[%s1733 + $0x18] sm:$0xff]
    %s1738 = scalar_lea.vmem [#allocation7], 48
    %v1739 = vld [vmem:[%s1738] sm:$0xff]
    %1740 = vmatprep.subr.mxu0 0.0
    %1741 = vmatpush1.msra.mxu0 %v93
    %1742 = vmatprep.subr.mxu0 0.0
    %1743 = vmatpush1.msra.mxu0 %v94
    %1744 = vmatprep.subr.mxu0 0.0
    %1745 = vmatpush1.msra.mxu0 %v95
    %1746 = vmatprep.subr.mxu0 0.0
    %1747 = vmatpush1.msra.mxu0 %v96
    %1748 = vmatprep.subr.mxu0 0.0
    %1749 = vmatpush1.msra.mxu0 %v97
    %1750 = vmatprep.subr.mxu0 0.0
    %1751 = vmatpush1.msra.mxu0 %v98
    %1752 = vmatprep.subr.mxu0 0.0
    %1753 = vmatpush1.msra.mxu0 %v99
    %1754 = vmatprep.subr.mxu0 0.0
    %1755 = vmatpush1.msra.mxu0 %v100
    %1756 = vmatprep.subr.mxu0 0.0
    %1757 = vmatpush1.msra.mxu0 %v101
    %1758 = vmatprep.subr.mxu0 0.0
    %1759 = vmatpush1.msra.mxu0 %v102
    %1760 = vmatprep.subr.mxu0 0.0
    %1761 = vmatpush1.msra.mxu0 %v103
    %1762 = vmatprep.subr.mxu0 0.0
    %1763 = vmatpush1.msra.mxu0 %v104
    %1764 = vmatprep.subr.mxu0 0.0
    %1765 = vmatpush1.msra.mxu0 %v105
    %1766 = vmatprep.subr.mxu0 0.0
    %1767 = vmatpush1.msra.mxu0 %v106
    %1768 = vmatprep.subr.mxu0 0.0
    %1769 = vmatpush1.msra.mxu0 %v107
    %1770 = vmatprep.subr.mxu0 0.0
    %1771 = vmatpush1.msra.mxu0 %v108
    %1772 = vmatprep.subr.mxu0 0.0
    %1773 = vmatpush1.msra.mxu0 0.0
    %1774 = vmatprep.subr.mxu0 0.0
    %1775 = vmatpush1.msra.mxu0 0.0
    %1776 = vmatprep.subr.mxu0 0.0
    %1777 = vmatpush1.msra.mxu0 0.0
    %1778 = vmatprep.subr.mxu0 0.0
    %1779 = vmatpush1.msra.mxu0 0.0
    %1780 = vmatprep.subr.mxu0 0.0
    %1781 = vmatpush1.msra.mxu0 0.0
    %1782 = vmatprep.subr.mxu0 0.0
    %1783 = vmatpush1.msra.mxu0 0.0
    %1784 = vmatprep.subr.mxu0 0.0
    %1785 = vmatpush1.msra.mxu0 0.0
    %1786 = vmatprep.subr.mxu0 0.0
    %1787 = vmatpush1.msra.mxu0 0.0
    %1788 = vmatprep.subr.mxu0 0.0
    %1789 = vmatpush1.msra.mxu0 0.0
    %1790 = vmatprep.subr.mxu0 0.0
    %1791 = vmatpush1.msra.mxu0 0.0
    %1792 = vmatprep.subr.mxu0 0.0
    %1793 = vmatpush1.msra.mxu0 0.0
    %1794 = vmatprep.subr.mxu0 0.0
    %1795 = vmatpush1.msra.mxu0 0.0
    %1796 = vmatprep.subr.mxu0 0.0
    %1797 = vmatpush1.msra.mxu0 0.0
    %1798 = vmatprep.subr.mxu0 0.0
    %1799 = vmatpush1.msra.mxu0 0.0
    %1800 = vmatprep.subr.mxu0 0.0
    %1801 = vmatpush1.msra.mxu0 0.0
    %1802 = vmatprep.subr.mxu0 0.0
    %1803 = vmatpush1.msra.mxu0 0.0
    %1804 = vmatprep.mubr.f32.mxu0 0.0
    %1805 = vmatmul.mubr.f32.gmra.mrb[0].mxu0 %v1728
    %v1806 = vpop.f32.mrb[0].mxu0
    %v1807 = vadd.f32 %v185, %v1806
    %v1808 = vpop.f32.mrb[0].mxu0
    %1809 = vdwg.mxu0
    %v1810 = vtanh.pop %v1807
    %v1811 = vsub.f32 %v1728, %v1810
    %1813 = vset.pattern.permute.xlu0 0
    %1814 = vperm.xlu0 %1813, %v1739
    %v1815 = vpop.permute.xlu0 %1814
    %v1817 = vmul.f32 %v1810, %v1815
    %v1818 = vadd.f32 %v1811, %v1817
    %1819 = vmatprep.subr.mxu0 %v110
    %1820 = vmatpush1.msra.mxu0 %v109
    %1821 = vmatprep.subr.mxu0 %v114
    %1822 = vmatpush1.msra.mxu0 %v113
    %1823 = vmatprep.subr.mxu0 %v118
    %1824 = vmatpush1.msra.mxu0 %v117
    %1825 = vmatprep.subr.mxu0 %v122
    %1826 = vmatpush1.msra.mxu0 %v121
    %1827 = vmatprep.subr.mxu0 %v126
    %1828 = vmatpush1.msra.mxu0 %v125
    %1829 = vmatprep.subr.mxu0 %v130
    %1830 = vmatpush1.msra.mxu0 %v129
    %1831 = vmatprep.subr.mxu0 %v134
    %1832 = vmatpush1.msra.mxu0 %v133
    %1833 = vmatprep.subr.mxu0 %v138
    %1834 = vmatpush1.msra.mxu0 %v137
    %1835 = vmatprep.subr.mxu0 %v142
    %1836 = vmatpush1.msra.mxu0 %v141
    %1837 = vmatprep.subr.mxu0 %v146
    %1838 = vmatpush1.msra.mxu0 %v145
    %1839 = vmatprep.subr.mxu0 %v150
    %1840 = vmatpush1.msra.mxu0 %v149
    %1841 = vmatprep.subr.mxu0 %v154
    %1842 = vmatpush1.msra.mxu0 %v153
    %1843 = vmatprep.subr.mxu0 %v158
    %1844 = vmatpush1.msra.mxu0 %v157
    %1845 = vmatprep.subr.mxu0 %v162
    %1846 = vmatpush1.msra.mxu0 %v161
    %1847 = vmatprep.subr.mxu0 %v166
    %1848 = vmatpush1.msra.mxu0 %v165
    %1849 = vmatprep.subr.mxu0 %v170
    %1850 = vmatpush1.msra.mxu0 %v169
    %1851 = vmatprep.subr.mxu0 0.0
    %1852 = vmatpush1.msra.mxu0 0.0
    %1853 = vmatprep.subr.mxu0 0.0
    %1854 = vmatpush1.msra.mxu0 0.0
    %1855 = vmatprep.subr.mxu0 0.0
    %1856 = vmatpush1.msra.mxu0 0.0
    %1857 = vmatprep.subr.mxu0 0.0
    %1858 = vmatpush1.msra.mxu0 0.0
    %1859 = vmatprep.subr.mxu0 0.0
    %1860 = vmatpush1.msra.mxu0 0.0
    %1861 = vmatprep.subr.mxu0 0.0
    %1862 = vmatpush1.msra.mxu0 0.0
    %1863 = vmatprep.subr.mxu0 0.0
    %1864 = vmatpush1.msra.mxu0 0.0
    %1865 = vmatprep.subr.mxu0 0.0
    %1866 = vmatpush1.msra.mxu0 0.0
    %1867 = vmatprep.subr.mxu0 0.0
    %1868 = vmatpush1.msra.mxu0 0.0
    %1869 = vmatprep.subr.mxu0 0.0
    %1870 = vmatpush1.msra.mxu0 0.0
    %1871 = vmatprep.subr.mxu0 0.0
    %1872 = vmatpush1.msra.mxu0 0.0
    %1873 = vmatprep.subr.mxu0 0.0
    %1874 = vmatpush1.msra.mxu0 0.0
    %1875 = vmatprep.subr.mxu0 0.0
    %1876 = vmatpush1.msra.mxu0 0.0
    %1877 = vmatprep.subr.mxu0 0.0
    %1878 = vmatpush1.msra.mxu0 0.0
    %1879 = vmatprep.subr.mxu0 0.0
    %1880 = vmatpush1.msra.mxu0 0.0
    %1881 = vmatprep.subr.mxu0 0.0
    %1882 = vmatpush1.msra.mxu0 0.0
    %1883 = vmatprep.mubr.f32.mxu0 0.0
    %1884 = vmatmul.mubr.f32.gmra.mrb[0].mxu0 %v1730
    %v1885 = vpop.f32.mrb[0].mxu0
    %v1886 = vadd.f32 %v1734, %v1885
    %v1887 = vpop.f32.mrb[0].mxu0
    %v1888 = vadd.f32 %v1735, %v1887
    %1889 = vdwg.mxu0
    %1890 = vmatprep.subr.mxu0 %v112
    %1891 = vmatpush1.msra.mxu0 %v111
    %1892 = vmatprep.subr.mxu0 %v116
    %1893 = vmatpush1.msra.mxu0 %v115
    %1894 = vmatprep.subr.mxu0 %v120
    %1895 = vmatpush1.msra.mxu0 %v119
    %1896 = vmatprep.subr.mxu0 %v124
    %1897 = vmatpush1.msra.mxu0 %v123
    %1898 = vmatprep.subr.mxu0 %v128
    %1899 = vmatpush1.msra.mxu0 %v127
    %1900 = vmatprep.subr.mxu0 %v132
    %1901 = vmatpush1.msra.mxu0 %v131
    %1902 = vmatprep.subr.mxu0 %v136
    %1903 = vmatpush1.msra.mxu0 %v135
    %1904 = vmatprep.subr.mxu0 %v140
    %1905 = vmatpush1.msra.mxu0 %v139
    %1906 = vmatprep.subr.mxu0 %v144
    %1907 = vmatpush1.msra.mxu0 %v143
    %1908 = vmatprep.subr.mxu0 %v148
    %1909 = vmatpush1.msra.mxu0 %v147
    %1910 = vmatprep.subr.mxu0 %v152
    %1911 = vmatpush1.msra.mxu0 %v151
    %1912 = vmatprep.subr.mxu0 %v156
    %1913 = vmatpush1.msra.mxu0 %v155
    %1914 = vmatprep.subr.mxu0 %v160
    %1915 = vmatpush1.msra.mxu0 %v159
    %1916 = vmatprep.subr.mxu0 %v164
    %1917 = vmatpush1.msra.mxu0 %v163
    %1918 = vmatprep.subr.mxu0 %v168
    %1919 = vmatpush1.msra.mxu0 %v167
    %1920 = vmatprep.subr.mxu0 %v172
    %1921 = vmatpush1.msra.mxu0 %v171
    %1922 = vmatprep.subr.mxu0 0.0
    %1923 = vmatpush1.msra.mxu0 0.0
    %1924 = vmatprep.subr.mxu0 0.0
    %1925 = vmatpush1.msra.mxu0 0.0
    %1926 = vmatprep.subr.mxu0 0.0
    %1927 = vmatpush1.msra.mxu0 0.0
    %1928 = vmatprep.subr.mxu0 0.0
    %1929 = vmatpush1.msra.mxu0 0.0
    %1930 = vmatprep.subr.mxu0 0.0
    %1931 = vmatpush1.msra.mxu0 0.0
    %1932 = vmatprep.subr.mxu0 0.0
    %1933 = vmatpush1.msra.mxu0 0.0
    %1934 = vmatprep.subr.mxu0 0.0
    %1935 = vmatpush1.msra.mxu0 0.0
    %1936 = vmatprep.subr.mxu0 0.0
    %1937 = vmatpush1.msra.mxu0 0.0
    %1938 = vmatprep.subr.mxu0 0.0
    %1939 = vmatpush1.msra.mxu0 0.0
    %1940 = vmatprep.subr.mxu0 0.0
    %1941 = vmatpush1.msra.mxu0 0.0
    %1942 = vmatprep.subr.mxu0 0.0
    %1943 = vmatpush1.msra.mxu0 0.0
    %1944 = vmatprep.subr.mxu0 0.0
    %1945 = vmatpush1.msra.mxu0 0.0
    %1946 = vmatprep.subr.mxu0 0.0
    %1947 = vmatpush1.msra.mxu0 0.0
    %1948 = vmatprep.subr.mxu0 0.0
    %1949 = vmatpush1.msra.mxu0 0.0
    %1950 = vmatprep.subr.mxu0 0.0
    %1951 = vmatpush1.msra.mxu0 0.0
    %1952 = vmatprep.subr.mxu0 0.0
    %1953 = vmatpush1.msra.mxu0 0.0
    %1954 = vmatprep.mubr.f32.mxu0 0.0
    %1955 = vmatmul.mubr.f32.gmra.mrb[0].mxu0 %v1730
    %v1956 = vpop.f32.mrb[0].mxu0
    %v1957 = vadd.f32 %v1736, %v1956
    %v1958 = vpop.f32.mrb[0].mxu0
    %v1959 = vadd.f32 %v1737, %v1958
    %1960 = vdwg.mxu0
    %v1961 = vxor.u32 %v1886, 2147483648
    %v1962 = vmul.f32 %v1961, 1.442695
    %v1963 = vpow.pop %v1962
    %v1964 = vadd.f32 %v1963, 1.0
    %v1965 = vrcp.pop %v1964
    %v1966 = vmul.f32 1.0, %v1965
    %v1967 = vxor.u32 %v1888, 2147483648
    %v1968 = vmul.f32 %v1967, 1.442695
    %v1969 = vpow.pop %v1968
    %v1970 = vadd.f32 %v1969, 1.0
    %v1971 = vrcp.pop %v1970
    %v1972 = vmul.f32 1.0, %v1971
    %v1973 = vxor.u32 %v1957, 2147483648
    %v1974 = vmul.f32 %v1973, 1.442695
    %v1975 = vpow.pop %v1974
    %v1976 = vadd.f32 %v1975, 1.0
    %v1977 = vrcp.pop %v1976
    %v1978 = vmul.f32 1.0, %v1977
    %v1979 = vxor.u32 %v1959, 2147483648
    %v1980 = vmul.f32 %v1979, 1.442695
    %v1981 = vpow.pop %v1980
    %v1982 = vadd.f32 %v1981, 1.0
    %v1983 = vrcp.pop %v1982
    %v1984 = vmul.f32 1.0, %v1983
    %v1985 = vmul.f32 %v1966, %v1818
    %v1986 = vmul.f32 %v1972, %v1984
    %v1987 = vadd.f32 %v1985, %v1986
    %v1988 = vtanh.pop %v1987
    %v1989 = vmul.f32 %v1978, %v1988
    %s1990 = scalar_lea.vmem [#allocation13], 48
    %1991 = vst [vmem:[%s1990] sm:$0xff] %v1989
    %s1992 = scalar_lea.vmem [#allocation4], 224
    %v1993 = vld [vmem:[%s1992] sm:$0xff]
    %v1994 = vld [vmem:[%s1992 + $0x8] sm:$0xff]
    %v1995 = vld [vmem:[%s1992 + $0x10] sm:$0xff]
    %v1996 = vld [vmem:[%s1992 + $0x18] sm:$0xff]
    %s1997 = scalar_lea.vmem [#allocation7], 56
    %v1998 = vld [vmem:[%s1997] sm:$0xff]
    %1999 = vmatprep.subr.mxu0 0.0
    %2000 = vmatpush1.msra.mxu0 %v93
    %2001 = vmatprep.subr.mxu0 0.0
    %2002 = vmatpush1.msra.mxu0 %v94
    %2003 = vmatprep.subr.mxu0 0.0
    %2004 = vmatpush1.msra.mxu0 %v95
    %2005 = vmatprep.subr.mxu0 0.0
    %2006 = vmatpush1.msra.mxu0 %v96
    %2007 = vmatprep.subr.mxu0 0.0
    %2008 = vmatpush1.msra.mxu0 %v97
    %2009 = vmatprep.subr.mxu0 0.0
    %2010 = vmatpush1.msra.mxu0 %v98
    %2011 = vmatprep.subr.mxu0 0.0
    %2012 = vmatpush1.msra.mxu0 %v99
    %2013 = vmatprep.subr.mxu0 0.0
    %2014 = vmatpush1.msra.mxu0 %v100
    %2015 = vmatprep.subr.mxu0 0.0
    %2016 = vmatpush1.msra.mxu0 %v101
    %2017 = vmatprep.subr.mxu0 0.0
    %2018 = vmatpush1.msra.mxu0 %v102
    %2019 = vmatprep.subr.mxu0 0.0
    %2020 = vmatpush1.msra.mxu0 %v103
    %2021 = vmatprep.subr.mxu0 0.0
    %2022 = vmatpush1.msra.mxu0 %v104
    %2023 = vmatprep.subr.mxu0 0.0
    %2024 = vmatpush1.msra.mxu0 %v105
    %2025 = vmatprep.subr.mxu0 0.0
    %2026 = vmatpush1.msra.mxu0 %v106
    %2027 = vmatprep.subr.mxu0 0.0
    %2028 = vmatpush1.msra.mxu0 %v107
    %2029 = vmatprep.subr.mxu0 0.0
    %2030 = vmatpush1.msra.mxu0 %v108
    %2031 = vmatprep.subr.mxu0 0.0
    %2032 = vmatpush1.msra.mxu0 0.0
    %2033 = vmatprep.subr.mxu0 0.0
    %2034 = vmatpush1.msra.mxu0 0.0
    %2035 = vmatprep.subr.mxu0 0.0
    %2036 = vmatpush1.msra.mxu0 0.0
    %2037 = vmatprep.subr.mxu0 0.0
    %2038 = vmatpush1.msra.mxu0 0.0
    %2039 = vmatprep.subr.mxu0 0.0
    %2040 = vmatpush1.msra.mxu0 0.0
    %2041 = vmatprep.subr.mxu0 0.0
    %2042 = vmatpush1.msra.mxu0 0.0
    %2043 = vmatprep.subr.mxu0 0.0
    %2044 = vmatpush1.msra.mxu0 0.0
    %2045 = vmatprep.subr.mxu0 0.0
    %2046 = vmatpush1.msra.mxu0 0.0
    %2047 = vmatprep.subr.mxu0 0.0
    %2048 = vmatpush1.msra.mxu0 0.0
    %2049 = vmatprep.subr.mxu0 0.0
    %2050 = vmatpush1.msra.mxu0 0.0
    %2051 = vmatprep.subr.mxu0 0.0
    %2052 = vmatpush1.msra.mxu0 0.0
    %2053 = vmatprep.subr.mxu0 0.0
    %2054 = vmatpush1.msra.mxu0 0.0
    %2055 = vmatprep.subr.mxu0 0.0
    %2056 = vmatpush1.msra.mxu0 0.0
    %2057 = vmatprep.subr.mxu0 0.0
    %2058 = vmatpush1.msra.mxu0 0.0
    %2059 = vmatprep.subr.mxu0 0.0
    %2060 = vmatpush1.msra.mxu0 0.0
    %2061 = vmatprep.subr.mxu0 0.0
    %2062 = vmatpush1.msra.mxu0 0.0
    %2063 = vmatprep.mubr.f32.mxu0 0.0
    %2064 = vmatmul.mubr.f32.gmra.mrb[0].mxu0 %v1987
    %v2065 = vpop.f32.mrb[0].mxu0
    %v2066 = vadd.f32 %v185, %v2065
    %v2067 = vpop.f32.mrb[0].mxu0
    %2068 = vdwg.mxu0
    %v2069 = vtanh.pop %v2066
    %v2070 = vsub.f32 %v1987, %v2069
    %2072 = vset.pattern.permute.xlu0 0
    %2073 = vperm.xlu0 %2072, %v1998
    %v2074 = vpop.permute.xlu0 %2073
    %v2076 = vmul.f32 %v2069, %v2074
    %v2077 = vadd.f32 %v2070, %v2076
    %2078 = vmatprep.subr.mxu0 %v110
    %2079 = vmatpush1.msra.mxu0 %v109
    %2080 = vmatprep.subr.mxu0 %v114
    %2081 = vmatpush1.msra.mxu0 %v113
    %2082 = vmatprep.subr.mxu0 %v118
    %2083 = vmatpush1.msra.mxu0 %v117
    %2084 = vmatprep.subr.mxu0 %v122
    %2085 = vmatpush1.msra.mxu0 %v121
    %2086 = vmatprep.subr.mxu0 %v126
    %2087 = vmatpush1.msra.mxu0 %v125
    %2088 = vmatprep.subr.mxu0 %v130
    %2089 = vmatpush1.msra.mxu0 %v129
    %2090 = vmatprep.subr.mxu0 %v134
    %2091 = vmatpush1.msra.mxu0 %v133
    %2092 = vmatprep.subr.mxu0 %v138
    %2093 = vmatpush1.msra.mxu0 %v137
    %2094 = vmatprep.subr.mxu0 %v142
    %2095 = vmatpush1.msra.mxu0 %v141
    %2096 = vmatprep.subr.mxu0 %v146
    %2097 = vmatpush1.msra.mxu0 %v145
    %2098 = vmatprep.subr.mxu0 %v150
    %2099 = vmatpush1.msra.mxu0 %v149
    %2100 = vmatprep.subr.mxu0 %v154
    %2101 = vmatpush1.msra.mxu0 %v153
    %2102 = vmatprep.subr.mxu0 %v158
    %2103 = vmatpush1.msra.mxu0 %v157
    %2104 = vmatprep.subr.mxu0 %v162
    %2105 = vmatpush1.msra.mxu0 %v161
    %2106 = vmatprep.subr.mxu0 %v166
    %2107 = vmatpush1.msra.mxu0 %v165
    %2108 = vmatprep.subr.mxu0 %v170
    %2109 = vmatpush1.msra.mxu0 %v169
    %2110 = vmatprep.subr.mxu0 0.0
    %2111 = vmatpush1.msra.mxu0 0.0
    %2112 = vmatprep.subr.mxu0 0.0
    %2113 = vmatpush1.msra.mxu0 0.0
    %2114 = vmatprep.subr.mxu0 0.0
    %2115 = vmatpush1.msra.mxu0 0.0
    %2116 = vmatprep.subr.mxu0 0.0
    %2117 = vmatpush1.msra.mxu0 0.0
    %2118 = vmatprep.subr.mxu0 0.0
    %2119 = vmatpush1.msra.mxu0 0.0
    %2120 = vmatprep.subr.mxu0 0.0
    %2121 = vmatpush1.msra.mxu0 0.0
    %2122 = vmatprep.subr.mxu0 0.0
    %2123 = vmatpush1.msra.mxu0 0.0
    %2124 = vmatprep.subr.mxu0 0.0
    %2125 = vmatpush1.msra.mxu0 0.0
    %2126 = vmatprep.subr.mxu0 0.0
    %2127 = vmatpush1.msra.mxu0 0.0
    %2128 = vmatprep.subr.mxu0 0.0
    %2129 = vmatpush1.msra.mxu0 0.0
    %2130 = vmatprep.subr.mxu0 0.0
    %2131 = vmatpush1.msra.mxu0 0.0
    %2132 = vmatprep.subr.mxu0 0.0
    %2133 = vmatpush1.msra.mxu0 0.0
    %2134 = vmatprep.subr.mxu0 0.0
    %2135 = vmatpush1.msra.mxu0 0.0
    %2136 = vmatprep.subr.mxu0 0.0
    %2137 = vmatpush1.msra.mxu0 0.0
    %2138 = vmatprep.subr.mxu0 0.0
    %2139 = vmatpush1.msra.mxu0 0.0
    %2140 = vmatprep.subr.mxu0 0.0
    %2141 = vmatpush1.msra.mxu0 0.0
    %2142 = vmatprep.mubr.f32.mxu0 0.0
    %2143 = vmatmul.mubr.f32.gmra.mrb[0].mxu0 %v1989
    %v2144 = vpop.f32.mrb[0].mxu0
    %v2145 = vadd.f32 %v1993, %v2144
    %v2146 = vpop.f32.mrb[0].mxu0
    %v2147 = vadd.f32 %v1994, %v2146
    %2148 = vdwg.mxu0
    %2149 = vmatprep.subr.mxu0 %v112
    %2150 = vmatpush1.msra.mxu0 %v111
    %2151 = vmatprep.subr.mxu0 %v116
    %2152 = vmatpush1.msra.mxu0 %v115
    %2153 = vmatprep.subr.mxu0 %v120
    %2154 = vmatpush1.msra.mxu0 %v119
    %2155 = vmatprep.subr.mxu0 %v124
    %2156 = vmatpush1.msra.mxu0 %v123
    %2157 = vmatprep.subr.mxu0 %v128
    %2158 = vmatpush1.msra.mxu0 %v127
    %2159 = vmatprep.subr.mxu0 %v132
    %2160 = vmatpush1.msra.mxu0 %v131
    %2161 = vmatprep.subr.mxu0 %v136
    %2162 = vmatpush1.msra.mxu0 %v135
    %2163 = vmatprep.subr.mxu0 %v140
    %2164 = vmatpush1.msra.mxu0 %v139
    %2165 = vmatprep.subr.mxu0 %v144
    %2166 = vmatpush1.msra.mxu0 %v143
    %2167 = vmatprep.subr.mxu0 %v148
    %2168 = vmatpush1.msra.mxu0 %v147
    %2169 = vmatprep.subr.mxu0 %v152
    %2170 = vmatpush1.msra.mxu0 %v151
    %2171 = vmatprep.subr.mxu0 %v156
    %2172 = vmatpush1.msra.mxu0 %v155
    %2173 = vmatprep.subr.mxu0 %v160
    %2174 = vmatpush1.msra.mxu0 %v159
    %2175 = vmatprep.subr.mxu0 %v164
    %2176 = vmatpush1.msra.mxu0 %v163
    %2177 = vmatprep.subr.mxu0 %v168
    %2178 = vmatpush1.msra.mxu0 %v167
    %2179 = vmatprep.subr.mxu0 %v172
    %2180 = vmatpush1.msra.mxu0 %v171
    %2181 = vmatprep.subr.mxu0 0.0
    %2182 = vmatpush1.msra.mxu0 0.0
    %2183 = vmatprep.subr.mxu0 0.0
    %2184 = vmatpush1.msra.mxu0 0.0
    %2185 = vmatprep.subr.mxu0 0.0
    %2186 = vmatpush1.msra.mxu0 0.0
    %2187 = vmatprep.subr.mxu0 0.0
    %2188 = vmatpush1.msra.mxu0 0.0
    %2189 = vmatprep.subr.mxu0 0.0
    %2190 = vmatpush1.msra.mxu0 0.0
    %2191 = vmatprep.subr.mxu0 0.0
    %2192 = vmatpush1.msra.mxu0 0.0
    %2193 = vmatprep.subr.mxu0 0.0
    %2194 = vmatpush1.msra.mxu0 0.0
    %2195 = vmatprep.subr.mxu0 0.0
    %2196 = vmatpush1.msra.mxu0 0.0
    %2197 = vmatprep.subr.mxu0 0.0
    %2198 = vmatpush1.msra.mxu0 0.0
    %2199 = vmatprep.subr.mxu0 0.0
    %2200 = vmatpush1.msra.mxu0 0.0
    %2201 = vmatprep.subr.mxu0 0.0
    %2202 = vmatpush1.msra.mxu0 0.0
    %2203 = vmatprep.subr.mxu0 0.0
    %2204 = vmatpush1.msra.mxu0 0.0
    %2205 = vmatprep.subr.mxu0 0.0
    %2206 = vmatpush1.msra.mxu0 0.0
    %2207 = vmatprep.subr.mxu0 0.0
    %2208 = vmatpush1.msra.mxu0 0.0
    %2209 = vmatprep.subr.mxu0 0.0
    %2210 = vmatpush1.msra.mxu0 0.0
    %2211 = vmatprep.subr.mxu0 0.0
    %2212 = vmatpush1.msra.mxu0 0.0
    %2213 = vmatprep.mubr.f32.mxu0 0.0
    %2214 = vmatmul.mubr.f32.gmra.mrb[0].mxu0 %v1989
    %v2215 = vpop.f32.mrb[0].mxu0
    %v2216 = vadd.f32 %v1995, %v2215
    %v2217 = vpop.f32.mrb[0].mxu0
    %v2218 = vadd.f32 %v1996, %v2217
    %2219 = vdwg.mxu0
    %v2220 = vxor.u32 %v2145, 2147483648
    %v2221 = vmul.f32 %v2220, 1.442695
    %v2222 = vpow.pop %v2221
    %v2223 = vadd.f32 %v2222, 1.0
    %v2224 = vrcp.pop %v2223
    %v2225 = vmul.f32 1.0, %v2224
    %v2226 = vxor.u32 %v2147, 2147483648
    %v2227 = vmul.f32 %v2226, 1.442695
    %v2228 = vpow.pop %v2227
    %v2229 = vadd.f32 %v2228, 1.0
    %v2230 = vrcp.pop %v2229
    %v2231 = vmul.f32 1.0, %v2230
    %v2232 = vxor.u32 %v2216, 2147483648
    %v2233 = vmul.f32 %v2232, 1.442695
    %v2234 = vpow.pop %v2233
    %v2235 = vadd.f32 %v2234, 1.0
    %v2236 = vrcp.pop %v2235
    %v2237 = vmul.f32 1.0, %v2236
    %v2238 = vxor.u32 %v2218, 2147483648
    %v2239 = vmul.f32 %v2238, 1.442695
    %v2240 = vpow.pop %v2239
    %v2241 = vadd.f32 %v2240, 1.0
    %v2242 = vrcp.pop %v2241
    %v2243 = vmul.f32 1.0, %v2242
    %v2244 = vmul.f32 %v2225, %v2077
    %v2245 = vmul.f32 %v2231, %v2243
    %v2246 = vadd.f32 %v2244, %v2245
    %v2247 = vtanh.pop %v2246
    %v2248 = vmul.f32 %v2237, %v2247
    %s2249 = scalar_lea.vmem [#allocation13], 56
    %2250 = vst [vmem:[%s2249] sm:$0xff] %v2248
    %2251 = vst [vmem:[#allocation2] sm:$0xff] %v2248
    %2252 = vst [vmem:[#allocation3] sm:$0xff] %v2246
    // Predicated region
    $region46: #{time_lstm.1} parent=1 // pred_check
      _
    $region47: #{time_lstm.1} parent=1 // pred_check_branch
      %2254 = sbr.rel (0) target = $region49
    $region48: #{time_lstm.1} parent=1 // pred_region
      %s2256 = ssub.s32 1024, 1024
      %2257 = vsyncadd [#allocation6], %s2256
      %s2258 = sshll.u32 [#allocation13], 4
      %s2259 = int_to_ptr.vmem [resolvable:$true] %s2258
      %2264 = dma.vmem_to_hbm [thread:$0]  %s2259, 1024, %s5, [#allocation6], 128, 128, 8
    $region49: #{time_lstm.1} parent=1 // pred_fallthru
      _
    // Predicated region
    $region50: #{time_lstm.1} parent=1 // pred_check
      _
    $region51: #{time_lstm.1} parent=1 // pred_check_branch
      %2266 = sbr.rel (0) target = $region53
    $region52: #{time_lstm.1} parent=1 // pred_region
      %2267 = dma.done [#allocation6], 1024
    $region53: #{time_lstm.1} parent=1 // pred_fallthru
      _
    %2268 = vsyncpa [#allocation5], 1
    %2269 = vsyncpa [#allocation8], 1
    %2270 = vsyncpa [#allocation11], 1
    %2271 = vsyncpa [#allocation6], 1

</llo_original>
